<compile_context>
chip_gen: v5e
topology: v5e:2x2
jax: 0.10.0
libtpu: 0.0.40
codegen_flags: <defaults>
</compile_context>

<pallas_src>
import functools

import jax
import jax.numpy as jnp
from jax import lax
from jax.experimental import pallas as pl
from jax.experimental.pallas import tpu as pltpu


def _simple_network_kernel(xy_ref, wt_ref, b_ref, out_ref, *, B, N, M,
                           k_neighbors, hard):
    # xy_ref : [B*N + B*M, D]  concatenated point sets (x rows first, then y rows)
    # wt_ref : [D, D]          pre-transposed, sqrt(1/tau)-scaled Linear weight
    # b_ref  : [1, D]          sqrt(1/tau)-scaled Linear bias
    # out_ref: [B, N, M]       sparse-softmax similarity
    xy = xy_ref[...]
    wt = wt_ref[...]
    b = b_ref[...]
    D = xy.shape[-1]

    hp = jax.lax.Precision.HIGHEST  # avoid bf16-pass rank flips under 1/tau blow-up

    # --- shared feature_extractor: ONE fused matmul for both point sets ---
    f = jnp.dot(xy, wt, preferred_element_type=jnp.float32, precision=hp) + b

    fx = f[:B * N].reshape(B, N, D)       # [B, N, D]
    fy = f[B * N:].reshape(B, M, D)       # [B, M, D]

    # --- pairwise logits, already scaled by 1/tau via the sqrt-folded weights ---
    # Batched NT contraction of the D axes (MXU-native, no transpose of fy).
    s = jnp.einsum('bnd,bmd->bnm', fx, fy,
                   preferred_element_type=jnp.float32, precision=hp)  # [B, N, M]

    neg_inf = jnp.float32(-1e30)
    col = lax.broadcasted_iota(jnp.int32, s.shape, 2)

    # --- exact top-k peel (torch.topk-style: exactly k per row, lowest-index
    # tie-break).  k is static -> fully unrolled.  Hard mode needs one peel only.
    n_peel = 1 if hard else k_neighbors
    s_work = s
    sel_masks = []   # k one-hot column masks per row
    peel_vals = []   # the k kept values per row, descending ([B, N, 1] each)
    for _ in range(n_peel):
        cur_max = jnp.max(s_work, axis=-1, keepdims=True)                    # [B,N,1]
        first_col = jnp.min(jnp.where(s_work >= cur_max, col, M),
                            axis=-1, keepdims=True)                          # [B,N,1]
        sel = col == first_col                                               # one col/row
        s_work = jnp.where(sel, neg_inf, s_work)
        sel_masks.append(sel)
        peel_vals.append(cur_max)

    if hard:
        # hard mode: forward emits the one-hot of the row argmax.
        out = jnp.where(sel_masks[0], 1.0, 0.0)
    else:
        # --- sparse softmax over the k kept values, WITHOUT exp over [B,N,M] ---
        row_max = peel_vals[0]
        e_vals = [jnp.ones_like(row_max)]                       # exp(0) for the max
        e_vals += [jnp.exp(v - row_max) for v in peel_vals[1:]] # k-1 exps on [B,N,1]
        denom = e_vals[0]
        for e in e_vals[1:]:
            denom = denom + e
        inv_denom = pl.reciprocal(denom, approx=True)           # EUP vrcp, VALU-free
        out = jnp.zeros_like(s)
        for sel, e in zip(sel_masks, e_vals):
            out = jnp.where(sel, e * inv_denom, out)

    out_ref[...] = out.astype(out_ref.dtype)


def simple_network(x, y, w, b, *, tau=0.07, k_neighbors=3, hard=False):
    """Forward pass of SimpleNetwork.

    x: [N, D] or [B, N, D]; y: [M, D] or [B, M, D] -> [N, M] or [B, N, M].
    w: [D, D] (PyTorch nn.Linear [out, in]); b: [D].
    """
    squeeze = (x.ndim == 2)
    if squeeze:
        x, y = x[None], y[None]
    B, N, D = x.shape
    _, M, _ = y.shape

    k = int(min(k_neighbors, M))   # guard: k > M degenerates to keeping all columns

    # Fold sqrt(1/tau) into the pre-transposed weight and bias on the host:
    # scores fx.fy then come out already scaled by 1/tau (zero in-kernel multiplies).
    scale = float(1.0 / float(tau)) ** 0.5
    wt = (jnp.asarray(w, jnp.float32) * jnp.float32(scale)).T          # [D, D]
    b2 = (jnp.asarray(b, jnp.float32) * jnp.float32(scale)).reshape(1, D)

    # One fused feature matmul operand: concatenate both point sets' rows (host
    # reshape/concat only, no transpose).
    xy = jnp.concatenate([jnp.asarray(x, jnp.float32).reshape(B * N, D),
                          jnp.asarray(y, jnp.float32).reshape(B * M, D)], axis=0)

    kernel = functools.partial(_simple_network_kernel,
                               B=B, N=N, M=M, k_neighbors=k, hard=hard)

    # Single block / no grid: at these sizes everything fits VMEM comfortably and a
    # grid would be pure per-step overhead (see TODO above for production tiling).
    out = pl.pallas_call(
        kernel,
        out_shape=jax.ShapeDtypeStruct((B, N, M), jnp.float32),
    )(xy, wt, b2)

    return out[0] if squeeze else out


if __name__ == "__main__":
    # Small shapes consistent with the module: feat_dim = 32; M = 128 keeps the
    # [B, N, M] output lane-dense (unmasked stores).
    B, N, M, D = 2, 16, 128, 32
    key = jax.random.PRNGKey(0)
    kx, ky, kw, kb = jax.random.split(key, 4)

    x = jax.random.normal(kx, (B, N, D), dtype=jnp.float32)
    y = jax.random.normal(ky, (B, M, D), dtype=jnp.float32)
    # Deterministic nn.Linear-style init (uniform in +-1/sqrt(D)).
    bound = 1.0 / (D ** 0.5)
    w = jax.random.uniform(kw, (D, D), minval=-bound, maxval=bound, dtype=jnp.float32)
    b = jax.random.uniform(kb, (D,), minval=-bound, maxval=bound, dtype=jnp.float32)

    tau, k_neighbors = 0.07, 3

    out = simple_network(x, y, w, b, tau=tau, k_neighbors=k_neighbors, hard=False)
    out = jax.block_until_ready(out)
    assert out.shape == (B, N, M)

    # Rows of the sparse softmax sum to ~1 (approx reciprocal -> loose atol).
    assert bool(jnp.allclose(jnp.sum(out, axis=-1), 1.0, atol=1e-2))
    # At tau = 0.07 some kept probabilities legitimately underflow f32 exp to exactly
    # 0 (the reference does too), so only bound the nonzero count per row.
    nnz = jnp.sum(out > 0, axis=-1)
    assert bool(jnp.all((nnz >= 1) & (nnz <= k_neighbors)))

    # Pure-JAX reference (exact top-k + softmax) at HIGHEST matmul precision.
    hp = jax.lax.Precision.HIGHEST
    fx_ref = jnp.matmul(x, w.T, precision=hp) + b                     # [B, N, D]
    fy_ref = jnp.matmul(y, w.T, precision=hp) + b                     # [B, M, D]
    s_ref = jnp.einsum('bnd,bmd->bnm', fx_ref, fy_ref, precision=hp) / tau
    vals, idx = jax.lax.top_k(s_ref, k_neighbors)                     # [B, N, k]
    p = jax.nn.softmax(vals, axis=-1)
    b_idx = jnp.arange(B)[:, None, None]
    n_idx = jnp.arange(N)[None, :, None]
    ref_out = jnp.zeros_like(s_ref).at[b_idx, n_idx, idx].set(p)
    assert bool(jnp.allclose(out, ref_out, atol=2e-2, rtol=2e-2))

    # hard mode: forward pass is the one-hot of the row argmax.
    out_hard = jax.block_until_ready(
        simple_network(x, y, w, b, tau=tau, k_neighbors=k_neighbors, hard=True))
    assert bool(jnp.allclose(jnp.sum(out_hard, axis=-1), 1.0))
    assert bool(jnp.all(jnp.sum(out_hard > 0, axis=-1) == 1))
    assert bool(jnp.all(jnp.argmax(out_hard, axis=-1) == jnp.argmax(s_ref, axis=-1)))

    print("KERNEL_OK")
</pallas_src>

<mosaic_0001>
module attributes {stable_mosaic.version = 11 : i64} {
  func.func @_simple_network_kernel(%arg0: memref<288x32xf32, #tpu.memory_space<vmem>>, %arg1: memref<32x32xf32, #tpu.memory_space<vmem>>, %arg2: memref<1x32xf32, #tpu.memory_space<vmem>>, %arg3: memref<2x16x128xf32, #tpu.memory_space<vmem>>) attributes {dimension_semantics = [], scalar_prefetch = 0 : i64, scratch_operands = 0 : i64, tpu.core_type = #tpu.core_type<tc>} {
    %c0 = arith.constant 0 : index
    %c0_0 = arith.constant 0 : index
    %0 = vector.load %arg0[%c0, %c0_0] : memref<288x32xf32, #tpu.memory_space<vmem>>, vector<288x32xf32>
    %c0_1 = arith.constant 0 : index
    %c0_2 = arith.constant 0 : index
    %1 = vector.load %arg1[%c0_1, %c0_2] : memref<32x32xf32, #tpu.memory_space<vmem>>, vector<32x32xf32>
    %c0_3 = arith.constant 0 : index
    %c0_4 = arith.constant 0 : index
    %2 = vector.load %arg2[%c0_3, %c0_4] : memref<1x32xf32, #tpu.memory_space<vmem>>, vector<1x32xf32>
    %cst = arith.constant dense<0.000000e+00> : vector<288x32xf32>
    %3 = tpu.matmul %0, %1, %cst {dimension_numbers = #tpu.dot_dimension_numbers<[1], [0], [0], [1], [0, 0, 1, 1], [], []>, precision = #tpu.contract_precision<fp32>} : vector<288x32xf32>, vector<32x32xf32>, vector<288x32xf32> -> vector<288x32xf32>
    %4 = vector.broadcast %2 : vector<1x32xf32> to vector<288x32xf32>
    %5 = arith.addf %3, %4 : vector<288x32xf32>
    %6 = vector.extract_strided_slice %5 {offsets = [0, 0], sizes = [32, 32], strides = [1, 1]} : vector<288x32xf32> to vector<32x32xf32>
    %7 = vector.shape_cast %6 : vector<32x32xf32> to vector<2x16x32xf32>
    %8 = vector.extract_strided_slice %5 {offsets = [32, 0], sizes = [256, 32], strides = [1, 1]} : vector<288x32xf32> to vector<256x32xf32>
    %9 = vector.shape_cast %8 : vector<256x32xf32> to vector<2x128x32xf32>
    "tpu.trace_start"() <{level = 10 : i32, message = "bnd,bmd->bnm"}> : () -> ()
    %cst_5 = arith.constant dense<0.000000e+00> : vector<2x16x128xf32>
    %10 = tpu.matmul %7, %9, %cst_5 {dimension_numbers = #tpu.dot_dimension_numbers<[2], [2], [1], [1], [0, 0, 0, 1, 1, 1], [0], [0]>, precision = #tpu.contract_precision<fp32>} : vector<2x16x32xf32>, vector<2x128x32xf32>, vector<2x16x128xf32> -> vector<2x16x128xf32>
    "tpu.trace_stop"() : () -> ()
    %11 = tpu.iota {dimensions = array<i32: 2>} : vector<2x16x128xi32>
    %cst_6 = arith.constant dense<0xFF800000> : vector<2x16xf32>
    %12 = vector.multi_reduction <maximumf>, %10, %cst_6 [2] : vector<2x16x128xf32> to vector<2x16xf32>
    %13 = vector.shape_cast %12 : vector<2x16xf32> to vector<2x16x1xf32>
    %14 = vector.broadcast %13 : vector<2x16x1xf32> to vector<2x16x128xf32>
    %15 = arith.cmpf oge, %10, %14 : vector<2x16x128xf32>
    %c128_i32 = arith.constant 128 : i32
    %16 = vector.broadcast %c128_i32 : i32 to vector<2x16x128xi32>
    %17 = arith.select %15, %11, %16 : vector<2x16x128xi1>, vector<2x16x128xi32>
    %cst_7 = arith.constant dense<2147483647> : vector<2x16xi32>
    %18 = vector.multi_reduction <minsi>, %17, %cst_7 [2] : vector<2x16x128xi32> to vector<2x16xi32>
    %19 = vector.shape_cast %18 : vector<2x16xi32> to vector<2x16x1xi32>
    %20 = vector.broadcast %19 : vector<2x16x1xi32> to vector<2x16x128xi32>
    %21 = arith.cmpi eq, %11, %20 : vector<2x16x128xi32>
    %cst_8 = arith.constant -1.000000e+30 : f32
    %22 = vector.broadcast %cst_8 : f32 to vector<2x16x128xf32>
    %23 = arith.select %21, %22, %10 : vector<2x16x128xi1>, vector<2x16x128xf32>
    %cst_9 = arith.constant dense<0xFF800000> : vector<2x16xf32>
    %24 = vector.multi_reduction <maximumf>, %23, %cst_9 [2] : vector<2x16x128xf32> to vector<2x16xf32>
    %25 = vector.shape_cast %24 : vector<2x16xf32> to vector<2x16x1xf32>
    %26 = vector.broadcast %25 : vector<2x16x1xf32> to vector<2x16x128xf32>
    %27 = arith.cmpf oge, %23, %26 : vector<2x16x128xf32>
    %c128_i32_10 = arith.constant 128 : i32
    %28 = vector.broadcast %c128_i32_10 : i32 to vector<2x16x128xi32>
    %29 = arith.select %27, %11, %28 : vector<2x16x128xi1>, vector<2x16x128xi32>
    %cst_11 = arith.constant dense<2147483647> : vector<2x16xi32>
    %30 = vector.multi_reduction <minsi>, %29, %cst_11 [2] : vector<2x16x128xi32> to vector<2x16xi32>
    %31 = vector.shape_cast %30 : vector<2x16xi32> to vector<2x16x1xi32>
    %32 = vector.broadcast %31 : vector<2x16x1xi32> to vector<2x16x128xi32>
    %33 = arith.cmpi eq, %11, %32 : vector<2x16x128xi32>
    %cst_12 = arith.constant -1.000000e+30 : f32
    %34 = vector.broadcast %cst_12 : f32 to vector<2x16x128xf32>
    %35 = arith.select %33, %34, %23 : vector<2x16x128xi1>, vector<2x16x128xf32>
    %cst_13 = arith.constant dense<0xFF800000> : vector<2x16xf32>
    %36 = vector.multi_reduction <maximumf>, %35, %cst_13 [2] : vector<2x16x128xf32> to vector<2x16xf32>
    %37 = vector.shape_cast %36 : vector<2x16xf32> to vector<2x16x1xf32>
    %38 = vector.broadcast %37 : vector<2x16x1xf32> to vector<2x16x128xf32>
    %39 = arith.cmpf oge, %35, %38 : vector<2x16x128xf32>
    %c128_i32_14 = arith.constant 128 : i32
    %40 = vector.broadcast %c128_i32_14 : i32 to vector<2x16x128xi32>
    %41 = arith.select %39, %11, %40 : vector<2x16x128xi1>, vector<2x16x128xi32>
    %cst_15 = arith.constant dense<2147483647> : vector<2x16xi32>
    %42 = vector.multi_reduction <minsi>, %41, %cst_15 [2] : vector<2x16x128xi32> to vector<2x16xi32>
    %43 = vector.shape_cast %42 : vector<2x16xi32> to vector<2x16x1xi32>
    %44 = vector.broadcast %43 : vector<2x16x1xi32> to vector<2x16x128xi32>
    %45 = arith.cmpi eq, %11, %44 : vector<2x16x128xi32>
    %cst_16 = arith.constant 1.000000e+00 : f32
    %46 = vector.broadcast %cst_16 : f32 to vector<2x16x1xf32>
    %47 = arith.subf %25, %13 : vector<2x16x1xf32>
    %48 = math.exp %47 : vector<2x16x1xf32>
    %49 = arith.subf %37, %13 : vector<2x16x1xf32>
    %50 = math.exp %49 : vector<2x16x1xf32>
    %51 = arith.addf %46, %48 : vector<2x16x1xf32>
    %52 = arith.addf %51, %50 : vector<2x16x1xf32>
    %53 = tpu.reciprocal %52 {approx = true} : vector<2x16x1xf32> -> vector<2x16x1xf32>
    %cst_17 = arith.constant 0.000000e+00 : f32
    %54 = vector.broadcast %cst_17 : f32 to vector<2x16x128xf32>
    %55 = arith.mulf %46, %53 : vector<2x16x1xf32>
    %56 = vector.shape_cast %55 : vector<2x16x1xf32> to vector<2x16x1xf32>
    %57 = vector.broadcast %56 : vector<2x16x1xf32> to vector<2x16x128xf32>
    %58 = arith.select %21, %57, %54 : vector<2x16x128xi1>, vector<2x16x128xf32>
    %59 = arith.mulf %48, %53 : vector<2x16x1xf32>
    %60 = vector.shape_cast %59 : vector<2x16x1xf32> to vector<2x16x1xf32>
    %61 = vector.broadcast %60 : vector<2x16x1xf32> to vector<2x16x128xf32>
    %62 = arith.select %33, %61, %58 : vector<2x16x128xi1>, vector<2x16x128xf32>
    %63 = arith.mulf %50, %53 : vector<2x16x1xf32>
    %64 = vector.shape_cast %63 : vector<2x16x1xf32> to vector<2x16x1xf32>
    %65 = vector.broadcast %64 : vector<2x16x1xf32> to vector<2x16x128xf32>
    %66 = arith.select %45, %65, %62 : vector<2x16x128xi1>, vector<2x16x128xf32>
    %c0_18 = arith.constant 0 : index
    %c0_19 = arith.constant 0 : index
    %c0_20 = arith.constant 0 : index
    %67 = vector.load %arg3[%c0_18, %c0_19, %c0_20] : memref<2x16x128xf32, #tpu.memory_space<vmem>>, vector<2x16x128xf32>
    tpu.vector_store %arg3[%c0_18, %c0_19, %c0_20], %66 {strides = array<i32>} : memref<2x16x128xf32, #tpu.memory_space<vmem>>, vector<2x16x128xf32>,
    return
  }
}

</mosaic_0001>

<llo_original>
// kernel: tpu_custom_call.1
$region0: #{tpu_custom_call.1}
  #allocation0 [shape = 'u32[]', space=smem, size = 0x4, offset = 0x4, fixed_abs, tag = 'smem constant byte address 0x4 - core index']
  #allocation1 [shape = 'u32[72,128]{1,0:T(1,128)}', space=vmem, size = 0x9000, scoped, tag = 'internal scratch']
  %s0 = inlined_call_operand.vmem [shape: f32[288,32], index: 0, kind: input, shape index: {}]
  %s1 = inlined_call_operand.vmem [shape: f32[32,32], index: 1, kind: input, shape index: {}]
  %s2 = inlined_call_operand.vmem [shape: f32[1,32], index: 2, kind: input, shape index: {}]
  %s3 = inlined_call_operand.hbm [shape: f32[2,16,128], index: 3, kind: output, shape index: {}]
  %s4 = sld [smem:[#allocation0]]
  $region22: #{tpu_custom_call.1} parent=0
    _
  %s6 = ssub.s32 1, %s4
  %s7 = scalar_select 0, %s6, %s4
  $region1: #{tpu_custom_call.1} parent=0
    #allocation2 [shape = 'u8[16384]{0}', space=vmem, size = 0x4000, scoped, tag = 'output window, operand 0, single buffered']
    #allocation3 [shape = 's32[1]{0}', space=sflag, size = 0x4, scoped, tag = 'scoped memory for tpu_custom_call.1']
    %8 = vsyncpa [#allocation3], 0
    // Predicated region
    $region2: #{tpu_custom_call.1} parent=1 // pred_check
      _
    $region3: #{tpu_custom_call.1} parent=1 // pred_check_branch
      %10 = sbr.rel (0) target = $region5
    $region4: #{tpu_custom_call.1} parent=1 // pred_region
      _
    $region5: #{tpu_custom_call.1} parent=1 // pred_fallthru
      _
    // Predicated region
    $region6: #{tpu_custom_call.1} parent=1 // pred_check
      _
    $region7: #{tpu_custom_call.1} parent=1 // pred_check_branch
      %12 = sbr.rel (0) target = $region9
    $region8: #{tpu_custom_call.1} parent=1 // pred_region
      _
    $region9: #{tpu_custom_call.1} parent=1 // pred_fallthru
      _
    // Predicated region
    $region10: #{tpu_custom_call.1} parent=1 // pred_check
      _
    $region11: #{tpu_custom_call.1} parent=1 // pred_check_branch
      %14 = sbr.rel (0) target = $region13
    $region12: #{tpu_custom_call.1} parent=1 // pred_region
      _
    $region13: #{tpu_custom_call.1} parent=1 // pred_fallthru
      _
    %v15 = vld [vmem:[%s0] sm:$0xff]
    %v16 = vld [vmem:[%s0 + $0x8] sm:$0xff]
    %v17 = vld [vmem:[%s0 + $0x10] sm:$0xff]
    %v18 = vld [vmem:[%s0 + $0x18] sm:$0xff]
    %v19 = vld [vmem:[%s0 + $0x20] sm:$0xff]
    %v20 = vld [vmem:[%s0 + $0x28] sm:$0xff]
    %v21 = vld [vmem:[%s0 + $0x30] sm:$0xff]
    %v22 = vld [vmem:[%s0 + $0x38] sm:$0xff]
    %v23 = vld [vmem:[%s0 + $0x40] sm:$0xff]
    %v24 = vld [vmem:[%s0 + $0x48] sm:$0xff]
    %v25 = vld [vmem:[%s0 + $0x50] sm:$0xff]
    %v26 = vld [vmem:[%s0 + $0x58] sm:$0xff]
    %v27 = vld [vmem:[%s0 + $0x60] sm:$0xff]
    %v28 = vld [vmem:[%s0 + $0x68] sm:$0xff]
    %v29 = vld [vmem:[%s0 + $0x70] sm:$0xff]
    %v30 = vld [vmem:[%s0 + $0x78] sm:$0xff]
    %v31 = vld [vmem:[%s0 + $0x80] sm:$0xff]
    %v32 = vld [vmem:[%s0 + $0x88] sm:$0xff]
    %v33 = vld [vmem:[%s0 + $0x90] sm:$0xff]
    %v34 = vld [vmem:[%s0 + $0x98] sm:$0xff]
    %v35 = vld [vmem:[%s0 + $0xa0] sm:$0xff]
    %v36 = vld [vmem:[%s0 + $0xa8] sm:$0xff]
    %v37 = vld [vmem:[%s0 + $0xb0] sm:$0xff]
    %v38 = vld [vmem:[%s0 + $0xb8] sm:$0xff]
    %v39 = vld [vmem:[%s0 + $0xc0] sm:$0xff]
    %v40 = vld [vmem:[%s0 + $0xc8] sm:$0xff]
    %v41 = vld [vmem:[%s0 + $0xd0] sm:$0xff]
    %v42 = vld [vmem:[%s0 + $0xd8] sm:$0xff]
    %v43 = vld [vmem:[%s0 + $0xe0] sm:$0xff]
    %v44 = vld [vmem:[%s0 + $0xe8] sm:$0xff]
    %v45 = vld [vmem:[%s0 + $0xf0] sm:$0xff]
    %v46 = vld [vmem:[%s0 + $0xf8] sm:$0xff]
    %v47 = vld [vmem:[%s0 + $0x100] sm:$0xff]
    %v48 = vld [vmem:[%s0 + $0x108] sm:$0xff]
    %v49 = vld [vmem:[%s0 + $0x110] sm:$0xff]
    %v50 = vld [vmem:[%s0 + $0x118] sm:$0xff]
    %v51 = vld [vmem:[%s1] sm:$0xff]
    %v52 = vld [vmem:[%s1 + $0x8] sm:$0xff]
    %v53 = vld [vmem:[%s1 + $0x10] sm:$0xff]
    %v54 = vld [vmem:[%s1 + $0x18] sm:$0xff]
    %v55 = vld [vmem:[%s2] sm:$0x1]
    %v57 = vperm.slane %v55, 0
    %vm59 = vcmask 261120
    %v61 = vsel %vm59, %v15, 0
    %v64 = vsel %vm59, %v16, 0
    %v67 = vsel %vm59, %v17, 0
    %v70 = vsel %vm59, %v18, 0
    %v73 = vsel %vm59, %v19, 0
    %v76 = vsel %vm59, %v20, 0
    %v79 = vsel %vm59, %v21, 0
    %v82 = vsel %vm59, %v22, 0
    %v85 = vsel %vm59, %v23, 0
    %v88 = vsel %vm59, %v24, 0
    %v91 = vsel %vm59, %v25, 0
    %v94 = vsel %vm59, %v26, 0
    %v97 = vsel %vm59, %v27, 0
    %v100 = vsel %vm59, %v28, 0
    %v103 = vsel %vm59, %v29, 0
    %v106 = vsel %vm59, %v30, 0
    %v109 = vsel %vm59, %v31, 0
    %v112 = vsel %vm59, %v32, 0
    %v115 = vsel %vm59, %v33, 0
    %v118 = vsel %vm59, %v34, 0
    %v121 = vsel %vm59, %v35, 0
    %v124 = vsel %vm59, %v36, 0
    %v127 = vsel %vm59, %v37, 0
    %v130 = vsel %vm59, %v38, 0
    %v133 = vsel %vm59, %v39, 0
    %v136 = vsel %vm59, %v40, 0
    %v139 = vsel %vm59, %v41, 0
    %v142 = vsel %vm59, %v42, 0
    %v145 = vsel %vm59, %v43, 0
    %v148 = vsel %vm59, %v44, 0
    %v151 = vsel %vm59, %v45, 0
    %v154 = vsel %vm59, %v46, 0
    %v157 = vsel %vm59, %v47, 0
    %v160 = vsel %vm59, %v48, 0
    %v163 = vsel %vm59, %v49, 0
    %v166 = vsel %vm59, %v50, 0
    %168 = vmatpush.msra.mxu0 0.0
    %169 = vmatpush.msra.mxu0 0.0
    %170 = vmatpush.msra.mxu0 0.0
    %171 = vmatpush.msra.mxu0 0.0
    %172 = vmatpush.msra.mxu0 0.0
    %173 = vmatpush.msra.mxu0 0.0
    %174 = vmatpush.msra.mxu0 0.0
    %175 = vmatpush.msra.mxu0 0.0
    %176 = vmatpush.msra.mxu0 0.0
    %177 = vmatpush.msra.mxu0 0.0
    %178 = vmatpush.msra.mxu0 0.0
    %179 = vmatpush.msra.mxu0 0.0
    %v180 = vand.u32 %v54, 4294901760
    %181 = vmatpush.msra.mxu0 %v180
    %v182 = vand.u32 %v53, 4294901760
    %183 = vmatpush.msra.mxu0 %v182
    %v184 = vand.u32 %v52, 4294901760
    %185 = vmatpush.msra.mxu0 %v184
    %v186 = vand.u32 %v51, 4294901760
    %187 = vmatpush.msra.mxu0 %v186
    %v188 = vand.u32 %v61, 4294901760
    %v189 = vsub.f32 %v61, %v188
    %v190 = vand.u32 %v189, 4294901760
    %v191 = vsub.f32 %v189, %v190
    %v192 = vand.u32 %v191, 4294901760
    %193 = vmatmul.f32.gmra.mxu0 %v192
    %v194 = vpop.f32.mrf.mxu0
    %v195 = vadd.f32 %v57, %v194
    %v196 = vand.u32 %v64, 4294901760
    %v197 = vsub.f32 %v64, %v196
    %v198 = vand.u32 %v197, 4294901760
    %v199 = vsub.f32 %v197, %v198
    %v200 = vand.u32 %v199, 4294901760
    %201 = vmatmul.f32.gmra.mxu0 %v200
    %v202 = vpop.f32.mrf.mxu0
    %v203 = vadd.f32 %v57, %v202
    %v204 = vand.u32 %v67, 4294901760
    %v205 = vsub.f32 %v67, %v204
    %v206 = vand.u32 %v205, 4294901760
    %v207 = vsub.f32 %v205, %v206
    %v208 = vand.u32 %v207, 4294901760
    %209 = vmatmul.f32.gmra.mxu0 %v208
    %v210 = vpop.f32.mrf.mxu0
    %v211 = vadd.f32 %v57, %v210
    %v212 = vand.u32 %v70, 4294901760
    %v213 = vsub.f32 %v70, %v212
    %v214 = vand.u32 %v213, 4294901760
    %v215 = vsub.f32 %v213, %v214
    %v216 = vand.u32 %v215, 4294901760
    %217 = vmatmul.f32.gmra.mxu0 %v216
    %v218 = vpop.f32.mrf.mxu0
    %v219 = vadd.f32 %v57, %v218
    %v220 = vand.u32 %v73, 4294901760
    %v221 = vsub.f32 %v73, %v220
    %v222 = vand.u32 %v221, 4294901760
    %v223 = vsub.f32 %v221, %v222
    %v224 = vand.u32 %v223, 4294901760
    %225 = vmatmul.f32.gmra.mxu0 %v224
    %v226 = vpop.f32.mrf.mxu0
    %v227 = vadd.f32 %v57, %v226
    %v228 = vand.u32 %v76, 4294901760
    %v229 = vsub.f32 %v76, %v228
    %v230 = vand.u32 %v229, 4294901760
    %v231 = vsub.f32 %v229, %v230
    %v232 = vand.u32 %v231, 4294901760
    %233 = vmatmul.f32.gmra.mxu0 %v232
    %v234 = vpop.f32.mrf.mxu0
    %v235 = vadd.f32 %v57, %v234
    %v236 = vand.u32 %v79, 4294901760
    %v237 = vsub.f32 %v79, %v236
    %v238 = vand.u32 %v237, 4294901760
    %v239 = vsub.f32 %v237, %v238
    %v240 = vand.u32 %v239, 4294901760
    %241 = vmatmul.f32.gmra.mxu0 %v240
    %v242 = vpop.f32.mrf.mxu0
    %v243 = vadd.f32 %v57, %v242
    %v244 = vand.u32 %v82, 4294901760
    %v245 = vsub.f32 %v82, %v244
    %v246 = vand.u32 %v245, 4294901760
    %v247 = vsub.f32 %v245, %v246
    %v248 = vand.u32 %v247, 4294901760
    %249 = vmatmul.f32.gmra.mxu0 %v248
    %v250 = vpop.f32.mrf.mxu0
    %v251 = vadd.f32 %v57, %v250
    %v252 = vand.u32 %v85, 4294901760
    %v253 = vsub.f32 %v85, %v252
    %v254 = vand.u32 %v253, 4294901760
    %v255 = vsub.f32 %v253, %v254
    %v256 = vand.u32 %v255, 4294901760
    %257 = vmatmul.f32.gmra.mxu0 %v256
    %v258 = vpop.f32.mrf.mxu0
    %v259 = vadd.f32 %v57, %v258
    %v260 = vand.u32 %v88, 4294901760
    %v261 = vsub.f32 %v88, %v260
    %v262 = vand.u32 %v261, 4294901760
    %v263 = vsub.f32 %v261, %v262
    %v264 = vand.u32 %v263, 4294901760
    %265 = vmatmul.f32.gmra.mxu0 %v264
    %v266 = vpop.f32.mrf.mxu0
    %v267 = vadd.f32 %v57, %v266
    %v268 = vand.u32 %v91, 4294901760
    %v269 = vsub.f32 %v91, %v268
    %v270 = vand.u32 %v269, 4294901760
    %v271 = vsub.f32 %v269, %v270
    %v272 = vand.u32 %v271, 4294901760
    %273 = vmatmul.f32.gmra.mxu0 %v272
    %v274 = vpop.f32.mrf.mxu0
    %v275 = vadd.f32 %v57, %v274
    %v276 = vand.u32 %v94, 4294901760
    %v277 = vsub.f32 %v94, %v276
    %v278 = vand.u32 %v277, 4294901760
    %v279 = vsub.f32 %v277, %v278
    %v280 = vand.u32 %v279, 4294901760
    %281 = vmatmul.f32.gmra.mxu0 %v280
    %v282 = vpop.f32.mrf.mxu0
    %v283 = vadd.f32 %v57, %v282
    %v284 = vand.u32 %v97, 4294901760
    %v285 = vsub.f32 %v97, %v284
    %v286 = vand.u32 %v285, 4294901760
    %v287 = vsub.f32 %v285, %v286
    %v288 = vand.u32 %v287, 4294901760
    %289 = vmatmul.f32.gmra.mxu0 %v288
    %v290 = vpop.f32.mrf.mxu0
    %v291 = vadd.f32 %v57, %v290
    %v292 = vand.u32 %v100, 4294901760
    %v293 = vsub.f32 %v100, %v292
    %v294 = vand.u32 %v293, 4294901760
    %v295 = vsub.f32 %v293, %v294
    %v296 = vand.u32 %v295, 4294901760
    %297 = vmatmul.f32.gmra.mxu0 %v296
    %v298 = vpop.f32.mrf.mxu0
    %v299 = vadd.f32 %v57, %v298
    %v300 = vand.u32 %v103, 4294901760
    %v301 = vsub.f32 %v103, %v300
    %v302 = vand.u32 %v301, 4294901760
    %v303 = vsub.f32 %v301, %v302
    %v304 = vand.u32 %v303, 4294901760
    %305 = vmatmul.f32.gmra.mxu0 %v304
    %v306 = vpop.f32.mrf.mxu0
    %v307 = vadd.f32 %v57, %v306
    %v308 = vand.u32 %v106, 4294901760
    %v309 = vsub.f32 %v106, %v308
    %v310 = vand.u32 %v309, 4294901760
    %v311 = vsub.f32 %v309, %v310
    %v312 = vand.u32 %v311, 4294901760
    %313 = vmatmul.f32.gmra.mxu0 %v312
    %v314 = vpop.f32.mrf.mxu0
    %v315 = vadd.f32 %v57, %v314
    %v316 = vand.u32 %v109, 4294901760
    %v317 = vsub.f32 %v109, %v316
    %v318 = vand.u32 %v317, 4294901760
    %v319 = vsub.f32 %v317, %v318
    %v320 = vand.u32 %v319, 4294901760
    %321 = vmatmul.f32.gmra.mxu0 %v320
    %v322 = vpop.f32.mrf.mxu0
    %v323 = vadd.f32 %v57, %v322
    %v324 = vand.u32 %v112, 4294901760
    %v325 = vsub.f32 %v112, %v324
    %v326 = vand.u32 %v325, 4294901760
    %v327 = vsub.f32 %v325, %v326
    %v328 = vand.u32 %v327, 4294901760
    %329 = vmatmul.f32.gmra.mxu0 %v328
    %v330 = vpop.f32.mrf.mxu0
    %v331 = vadd.f32 %v57, %v330
    %v332 = vand.u32 %v115, 4294901760
    %v333 = vsub.f32 %v115, %v332
    %v334 = vand.u32 %v333, 4294901760
    %v335 = vsub.f32 %v333, %v334
    %v336 = vand.u32 %v335, 4294901760
    %337 = vmatmul.f32.gmra.mxu0 %v336
    %v338 = vpop.f32.mrf.mxu0
    %v339 = vadd.f32 %v57, %v338
    %v340 = vand.u32 %v118, 4294901760
    %v341 = vsub.f32 %v118, %v340
    %v342 = vand.u32 %v341, 4294901760
    %v343 = vsub.f32 %v341, %v342
    %v344 = vand.u32 %v343, 4294901760
    %345 = vmatmul.f32.gmra.mxu0 %v344
    %v346 = vpop.f32.mrf.mxu0
    %v347 = vadd.f32 %v57, %v346
    %v348 = vand.u32 %v121, 4294901760
    %v349 = vsub.f32 %v121, %v348
    %v350 = vand.u32 %v349, 4294901760
    %v351 = vsub.f32 %v349, %v350
    %v352 = vand.u32 %v351, 4294901760
    %353 = vmatmul.f32.gmra.mxu0 %v352
    %v354 = vpop.f32.mrf.mxu0
    %v355 = vadd.f32 %v57, %v354
    %v356 = vand.u32 %v124, 4294901760
    %v357 = vsub.f32 %v124, %v356
    %v358 = vand.u32 %v357, 4294901760
    %v359 = vsub.f32 %v357, %v358
    %v360 = vand.u32 %v359, 4294901760
    %361 = vmatmul.f32.gmra.mxu0 %v360
    %v362 = vpop.f32.mrf.mxu0
    %v363 = vadd.f32 %v57, %v362
    %v364 = vand.u32 %v127, 4294901760
    %v365 = vsub.f32 %v127, %v364
    %v366 = vand.u32 %v365, 4294901760
    %v367 = vsub.f32 %v365, %v366
    %v368 = vand.u32 %v367, 4294901760
    %369 = vmatmul.f32.gmra.mxu0 %v368
    %v370 = vpop.f32.mrf.mxu0
    %v371 = vadd.f32 %v57, %v370
    %v372 = vand.u32 %v130, 4294901760
    %v373 = vsub.f32 %v130, %v372
    %v374 = vand.u32 %v373, 4294901760
    %v375 = vsub.f32 %v373, %v374
    %v376 = vand.u32 %v375, 4294901760
    %377 = vmatmul.f32.gmra.mxu0 %v376
    %v378 = vpop.f32.mrf.mxu0
    %v379 = vadd.f32 %v57, %v378
    %v380 = vand.u32 %v133, 4294901760
    %v381 = vsub.f32 %v133, %v380
    %v382 = vand.u32 %v381, 4294901760
    %v383 = vsub.f32 %v381, %v382
    %v384 = vand.u32 %v383, 4294901760
    %385 = vmatmul.f32.gmra.mxu0 %v384
    %v386 = vpop.f32.mrf.mxu0
    %v387 = vadd.f32 %v57, %v386
    %v388 = vand.u32 %v136, 4294901760
    %v389 = vsub.f32 %v136, %v388
    %v390 = vand.u32 %v389, 4294901760
    %v391 = vsub.f32 %v389, %v390
    %v392 = vand.u32 %v391, 4294901760
    %393 = vmatmul.f32.gmra.mxu0 %v392
    %v394 = vpop.f32.mrf.mxu0
    %v395 = vadd.f32 %v57, %v394
    %v396 = vand.u32 %v139, 4294901760
    %v397 = vsub.f32 %v139, %v396
    %v398 = vand.u32 %v397, 4294901760
    %v399 = vsub.f32 %v397, %v398
    %v400 = vand.u32 %v399, 4294901760
    %401 = vmatmul.f32.gmra.mxu0 %v400
    %v402 = vpop.f32.mrf.mxu0
    %v403 = vadd.f32 %v57, %v402
    %v404 = vand.u32 %v142, 4294901760
    %v405 = vsub.f32 %v142, %v404
    %v406 = vand.u32 %v405, 4294901760
    %v407 = vsub.f32 %v405, %v406
    %v408 = vand.u32 %v407, 4294901760
    %409 = vmatmul.f32.gmra.mxu0 %v408
    %v410 = vpop.f32.mrf.mxu0
    %v411 = vadd.f32 %v57, %v410
    %v412 = vand.u32 %v145, 4294901760
    %v413 = vsub.f32 %v145, %v412
    %v414 = vand.u32 %v413, 4294901760
    %v415 = vsub.f32 %v413, %v414
    %v416 = vand.u32 %v415, 4294901760
    %417 = vmatmul.f32.gmra.mxu0 %v416
    %v418 = vpop.f32.mrf.mxu0
    %v419 = vadd.f32 %v57, %v418
    %v420 = vand.u32 %v148, 4294901760
    %v421 = vsub.f32 %v148, %v420
    %v422 = vand.u32 %v421, 4294901760
    %v423 = vsub.f32 %v421, %v422
    %v424 = vand.u32 %v423, 4294901760
    %425 = vmatmul.f32.gmra.mxu0 %v424
    %v426 = vpop.f32.mrf.mxu0
    %v427 = vadd.f32 %v57, %v426
    %v428 = vand.u32 %v151, 4294901760
    %v429 = vsub.f32 %v151, %v428
    %v430 = vand.u32 %v429, 4294901760
    %v431 = vsub.f32 %v429, %v430
    %v432 = vand.u32 %v431, 4294901760
    %433 = vmatmul.f32.gmra.mxu0 %v432
    %v434 = vpop.f32.mrf.mxu0
    %v435 = vadd.f32 %v57, %v434
    %v436 = vand.u32 %v154, 4294901760
    %v437 = vsub.f32 %v154, %v436
    %v438 = vand.u32 %v437, 4294901760
    %v439 = vsub.f32 %v437, %v438
    %v440 = vand.u32 %v439, 4294901760
    %441 = vmatmul.f32.gmra.mxu0 %v440
    %v442 = vpop.f32.mrf.mxu0
    %v443 = vadd.f32 %v57, %v442
    %v444 = vand.u32 %v157, 4294901760
    %v445 = vsub.f32 %v157, %v444
    %v446 = vand.u32 %v445, 4294901760
    %v447 = vsub.f32 %v445, %v446
    %v448 = vand.u32 %v447, 4294901760
    %449 = vmatmul.f32.gmra.mxu0 %v448
    %v450 = vpop.f32.mrf.mxu0
    %v451 = vadd.f32 %v57, %v450
    %v452 = vand.u32 %v160, 4294901760
    %v453 = vsub.f32 %v160, %v452
    %v454 = vand.u32 %v453, 4294901760
    %v455 = vsub.f32 %v453, %v454
    %v456 = vand.u32 %v455, 4294901760
    %457 = vmatmul.f32.gmra.mxu0 %v456
    %v458 = vpop.f32.mrf.mxu0
    %v459 = vadd.f32 %v57, %v458
    %v460 = vand.u32 %v163, 4294901760
    %v461 = vsub.f32 %v163, %v460
    %v462 = vand.u32 %v461, 4294901760
    %v463 = vsub.f32 %v461, %v462
    %v464 = vand.u32 %v463, 4294901760
    %465 = vmatmul.f32.gmra.mxu0 %v464
    %v466 = vpop.f32.mrf.mxu0
    %v467 = vadd.f32 %v57, %v466
    %v468 = vand.u32 %v166, 4294901760
    %v469 = vsub.f32 %v166, %v468
    %v470 = vand.u32 %v469, 4294901760
    %v471 = vsub.f32 %v469, %v470
    %v472 = vand.u32 %v471, 4294901760
    %473 = vmatmul.f32.gmra.mxu0 %v472
    %v474 = vpop.f32.mrf.mxu0
    %v475 = vadd.f32 %v57, %v474
    %476 = vdwg.mxu0
    %477 = vmatpush.msra.mxu0 0.0
    %478 = vmatpush.msra.mxu0 0.0
    %479 = vmatpush.msra.mxu0 0.0
    %480 = vmatpush.msra.mxu0 0.0
    %481 = vmatpush.msra.mxu0 0.0
    %482 = vmatpush.msra.mxu0 0.0
    %483 = vmatpush.msra.mxu0 0.0
    %484 = vmatpush.msra.mxu0 0.0
    %485 = vmatpush.msra.mxu0 0.0
    %486 = vmatpush.msra.mxu0 0.0
    %487 = vmatpush.msra.mxu0 0.0
    %488 = vmatpush.msra.mxu0 0.0
    %v489 = vand.u32 %v54, 4294901760
    %v490 = vsub.f32 %v54, %v489
    %v491 = vand.u32 %v490, 4294901760
    %v492 = vsub.f32 %v490, %v491
    %v493 = vand.u32 %v492, 4294901760
    %494 = vmatpush.msra.mxu0 %v493
    %v495 = vand.u32 %v53, 4294901760
    %v496 = vsub.f32 %v53, %v495
    %v497 = vand.u32 %v496, 4294901760
    %v498 = vsub.f32 %v496, %v497
    %v499 = vand.u32 %v498, 4294901760
    %500 = vmatpush.msra.mxu0 %v499
    %v501 = vand.u32 %v52, 4294901760
    %v502 = vsub.f32 %v52, %v501
    %v503 = vand.u32 %v502, 4294901760
    %v504 = vsub.f32 %v502, %v503
    %v505 = vand.u32 %v504, 4294901760
    %506 = vmatpush.msra.mxu0 %v505
    %v507 = vand.u32 %v51, 4294901760
    %v508 = vsub.f32 %v51, %v507
    %v509 = vand.u32 %v508, 4294901760
    %v510 = vsub.f32 %v508, %v509
    %v511 = vand.u32 %v510, 4294901760
    %512 = vmatpush.msra.mxu0 %v511
    %v513 = vand.u32 %v61, 4294901760
    %514 = vmatmul.f32.gmra.mxu0 %v513
    %v515 = vpop.f32.mrf.mxu0
    %v516 = vadd.f32 %v195, %v515
    %v517 = vand.u32 %v64, 4294901760
    %518 = vmatmul.f32.gmra.mxu0 %v517
    %v519 = vpop.f32.mrf.mxu0
    %v520 = vadd.f32 %v203, %v519
    %v521 = vand.u32 %v67, 4294901760
    %522 = vmatmul.f32.gmra.mxu0 %v521
    %v523 = vpop.f32.mrf.mxu0
    %v524 = vadd.f32 %v211, %v523
    %v525 = vand.u32 %v70, 4294901760
    %526 = vmatmul.f32.gmra.mxu0 %v525
    %v527 = vpop.f32.mrf.mxu0
    %v528 = vadd.f32 %v219, %v527
    %v529 = vand.u32 %v73, 4294901760
    %530 = vmatmul.f32.gmra.mxu0 %v529
    %v531 = vpop.f32.mrf.mxu0
    %v532 = vadd.f32 %v227, %v531
    %v533 = vand.u32 %v76, 4294901760
    %534 = vmatmul.f32.gmra.mxu0 %v533
    %v535 = vpop.f32.mrf.mxu0
    %v536 = vadd.f32 %v235, %v535
    %v537 = vand.u32 %v79, 4294901760
    %538 = vmatmul.f32.gmra.mxu0 %v537
    %v539 = vpop.f32.mrf.mxu0
    %v540 = vadd.f32 %v243, %v539
    %v541 = vand.u32 %v82, 4294901760
    %542 = vmatmul.f32.gmra.mxu0 %v541
    %v543 = vpop.f32.mrf.mxu0
    %v544 = vadd.f32 %v251, %v543
    %v545 = vand.u32 %v85, 4294901760
    %546 = vmatmul.f32.gmra.mxu0 %v545
    %v547 = vpop.f32.mrf.mxu0
    %v548 = vadd.f32 %v259, %v547
    %v549 = vand.u32 %v88, 4294901760
    %550 = vmatmul.f32.gmra.mxu0 %v549
    %v551 = vpop.f32.mrf.mxu0
    %v552 = vadd.f32 %v267, %v551
    %v553 = vand.u32 %v91, 4294901760
    %554 = vmatmul.f32.gmra.mxu0 %v553
    %v555 = vpop.f32.mrf.mxu0
    %v556 = vadd.f32 %v275, %v555
    %v557 = vand.u32 %v94, 4294901760
    %558 = vmatmul.f32.gmra.mxu0 %v557
    %v559 = vpop.f32.mrf.mxu0
    %v560 = vadd.f32 %v283, %v559
    %v561 = vand.u32 %v97, 4294901760
    %562 = vmatmul.f32.gmra.mxu0 %v561
    %v563 = vpop.f32.mrf.mxu0
    %v564 = vadd.f32 %v291, %v563
    %v565 = vand.u32 %v100, 4294901760
    %566 = vmatmul.f32.gmra.mxu0 %v565
    %v567 = vpop.f32.mrf.mxu0
    %v568 = vadd.f32 %v299, %v567
    %v569 = vand.u32 %v103, 4294901760
    %570 = vmatmul.f32.gmra.mxu0 %v569
    %v571 = vpop.f32.mrf.mxu0
    %v572 = vadd.f32 %v307, %v571
    %v573 = vand.u32 %v106, 4294901760
    %574 = vmatmul.f32.gmra.mxu0 %v573
    %v575 = vpop.f32.mrf.mxu0
    %v576 = vadd.f32 %v315, %v575
    %v577 = vand.u32 %v109, 4294901760
    %578 = vmatmul.f32.gmra.mxu0 %v577
    %v579 = vpop.f32.mrf.mxu0
    %v580 = vadd.f32 %v323, %v579
    %v581 = vand.u32 %v112, 4294901760
    %582 = vmatmul.f32.gmra.mxu0 %v581
    %v583 = vpop.f32.mrf.mxu0
    %v584 = vadd.f32 %v331, %v583
    %v585 = vand.u32 %v115, 4294901760
    %586 = vmatmul.f32.gmra.mxu0 %v585
    %v587 = vpop.f32.mrf.mxu0
    %v588 = vadd.f32 %v339, %v587
    %v589 = vand.u32 %v118, 4294901760
    %590 = vmatmul.f32.gmra.mxu0 %v589
    %v591 = vpop.f32.mrf.mxu0
    %v592 = vadd.f32 %v347, %v591
    %v593 = vand.u32 %v121, 4294901760
    %594 = vmatmul.f32.gmra.mxu0 %v593
    %v595 = vpop.f32.mrf.mxu0
    %v596 = vadd.f32 %v355, %v595
    %v597 = vand.u32 %v124, 4294901760
    %598 = vmatmul.f32.gmra.mxu0 %v597
    %v599 = vpop.f32.mrf.mxu0
    %v600 = vadd.f32 %v363, %v599
    %v601 = vand.u32 %v127, 4294901760
    %602 = vmatmul.f32.gmra.mxu0 %v601
    %v603 = vpop.f32.mrf.mxu0
    %v604 = vadd.f32 %v371, %v603
    %v605 = vand.u32 %v130, 4294901760
    %606 = vmatmul.f32.gmra.mxu0 %v605
    %v607 = vpop.f32.mrf.mxu0
    %v608 = vadd.f32 %v379, %v607
    %v609 = vand.u32 %v133, 4294901760
    %610 = vmatmul.f32.gmra.mxu0 %v609
    %v611 = vpop.f32.mrf.mxu0
    %v612 = vadd.f32 %v387, %v611
    %v613 = vand.u32 %v136, 4294901760
    %614 = vmatmul.f32.gmra.mxu0 %v613
    %v615 = vpop.f32.mrf.mxu0
    %v616 = vadd.f32 %v395, %v615
    %v617 = vand.u32 %v139, 4294901760
    %618 = vmatmul.f32.gmra.mxu0 %v617
    %v619 = vpop.f32.mrf.mxu0
    %v620 = vadd.f32 %v403, %v619
    %v621 = vand.u32 %v142, 4294901760
    %622 = vmatmul.f32.gmra.mxu0 %v621
    %v623 = vpop.f32.mrf.mxu0
    %v624 = vadd.f32 %v411, %v623
    %v625 = vand.u32 %v145, 4294901760
    %626 = vmatmul.f32.gmra.mxu0 %v625
    %v627 = vpop.f32.mrf.mxu0
    %v628 = vadd.f32 %v419, %v627
    %v629 = vand.u32 %v148, 4294901760
    %630 = vmatmul.f32.gmra.mxu0 %v629
    %v631 = vpop.f32.mrf.mxu0
    %v632 = vadd.f32 %v427, %v631
    %v633 = vand.u32 %v151, 4294901760
    %634 = vmatmul.f32.gmra.mxu0 %v633
    %v635 = vpop.f32.mrf.mxu0
    %v636 = vadd.f32 %v435, %v635
    %v637 = vand.u32 %v154, 4294901760
    %638 = vmatmul.f32.gmra.mxu0 %v637
    %v639 = vpop.f32.mrf.mxu0
    %v640 = vadd.f32 %v443, %v639
    %v641 = vand.u32 %v157, 4294901760
    %642 = vmatmul.f32.gmra.mxu0 %v641
    %v643 = vpop.f32.mrf.mxu0
    %v644 = vadd.f32 %v451, %v643
    %v645 = vand.u32 %v160, 4294901760
    %646 = vmatmul.f32.gmra.mxu0 %v645
    %v647 = vpop.f32.mrf.mxu0
    %v648 = vadd.f32 %v459, %v647
    %v649 = vand.u32 %v163, 4294901760
    %650 = vmatmul.f32.gmra.mxu0 %v649
    %v651 = vpop.f32.mrf.mxu0
    %v652 = vadd.f32 %v467, %v651
    %v653 = vand.u32 %v166, 4294901760
    %654 = vmatmul.f32.gmra.mxu0 %v653
    %v655 = vpop.f32.mrf.mxu0
    %v656 = vadd.f32 %v475, %v655
    %657 = vdwg.mxu0
    %658 = vmatpush.msra.mxu0 0.0
    %659 = vmatpush.msra.mxu0 0.0
    %660 = vmatpush.msra.mxu0 0.0
    %661 = vmatpush.msra.mxu0 0.0
    %662 = vmatpush.msra.mxu0 0.0
    %663 = vmatpush.msra.mxu0 0.0
    %664 = vmatpush.msra.mxu0 0.0
    %665 = vmatpush.msra.mxu0 0.0
    %666 = vmatpush.msra.mxu0 0.0
    %667 = vmatpush.msra.mxu0 0.0
    %668 = vmatpush.msra.mxu0 0.0
    %669 = vmatpush.msra.mxu0 0.0
    %v670 = vand.u32 %v54, 4294901760
    %v671 = vsub.f32 %v54, %v670
    %672 = vmatpush.msra.mxu0 %v671
    %v673 = vand.u32 %v53, 4294901760
    %v674 = vsub.f32 %v53, %v673
    %675 = vmatpush.msra.mxu0 %v674
    %v676 = vand.u32 %v52, 4294901760
    %v677 = vsub.f32 %v52, %v676
    %678 = vmatpush.msra.mxu0 %v677
    %v679 = vand.u32 %v51, 4294901760
    %v680 = vsub.f32 %v51, %v679
    %681 = vmatpush.msra.mxu0 %v680
    %v682 = vand.u32 %v61, 4294901760
    %v683 = vsub.f32 %v61, %v682
    %684 = vmatmul.f32.gmra.mxu0 %v683
    %v685 = vpop.f32.mrf.mxu0
    %v686 = vadd.f32 %v516, %v685
    %v687 = vand.u32 %v64, 4294901760
    %v688 = vsub.f32 %v64, %v687
    %689 = vmatmul.f32.gmra.mxu0 %v688
    %v690 = vpop.f32.mrf.mxu0
    %v691 = vadd.f32 %v520, %v690
    %v692 = vand.u32 %v67, 4294901760
    %v693 = vsub.f32 %v67, %v692
    %694 = vmatmul.f32.gmra.mxu0 %v693
    %v695 = vpop.f32.mrf.mxu0
    %v696 = vadd.f32 %v524, %v695
    %v697 = vand.u32 %v70, 4294901760
    %v698 = vsub.f32 %v70, %v697
    %699 = vmatmul.f32.gmra.mxu0 %v698
    %v700 = vpop.f32.mrf.mxu0
    %v701 = vadd.f32 %v528, %v700
    %v702 = vand.u32 %v73, 4294901760
    %v703 = vsub.f32 %v73, %v702
    %704 = vmatmul.f32.gmra.mxu0 %v703
    %v705 = vpop.f32.mrf.mxu0
    %v706 = vadd.f32 %v532, %v705
    %v707 = vand.u32 %v76, 4294901760
    %v708 = vsub.f32 %v76, %v707
    %709 = vmatmul.f32.gmra.mxu0 %v708
    %v710 = vpop.f32.mrf.mxu0
    %v711 = vadd.f32 %v536, %v710
    %v712 = vand.u32 %v79, 4294901760
    %v713 = vsub.f32 %v79, %v712
    %714 = vmatmul.f32.gmra.mxu0 %v713
    %v715 = vpop.f32.mrf.mxu0
    %v716 = vadd.f32 %v540, %v715
    %v717 = vand.u32 %v82, 4294901760
    %v718 = vsub.f32 %v82, %v717
    %719 = vmatmul.f32.gmra.mxu0 %v718
    %v720 = vpop.f32.mrf.mxu0
    %v721 = vadd.f32 %v544, %v720
    %v722 = vand.u32 %v85, 4294901760
    %v723 = vsub.f32 %v85, %v722
    %724 = vmatmul.f32.gmra.mxu0 %v723
    %v725 = vpop.f32.mrf.mxu0
    %v726 = vadd.f32 %v548, %v725
    %v727 = vand.u32 %v88, 4294901760
    %v728 = vsub.f32 %v88, %v727
    %729 = vmatmul.f32.gmra.mxu0 %v728
    %v730 = vpop.f32.mrf.mxu0
    %v731 = vadd.f32 %v552, %v730
    %v732 = vand.u32 %v91, 4294901760
    %v733 = vsub.f32 %v91, %v732
    %734 = vmatmul.f32.gmra.mxu0 %v733
    %v735 = vpop.f32.mrf.mxu0
    %v736 = vadd.f32 %v556, %v735
    %v737 = vand.u32 %v94, 4294901760
    %v738 = vsub.f32 %v94, %v737
    %739 = vmatmul.f32.gmra.mxu0 %v738
    %v740 = vpop.f32.mrf.mxu0
    %v741 = vadd.f32 %v560, %v740
    %v742 = vand.u32 %v97, 4294901760
    %v743 = vsub.f32 %v97, %v742
    %744 = vmatmul.f32.gmra.mxu0 %v743
    %v745 = vpop.f32.mrf.mxu0
    %v746 = vadd.f32 %v564, %v745
    %v747 = vand.u32 %v100, 4294901760
    %v748 = vsub.f32 %v100, %v747
    %749 = vmatmul.f32.gmra.mxu0 %v748
    %v750 = vpop.f32.mrf.mxu0
    %v751 = vadd.f32 %v568, %v750
    %v752 = vand.u32 %v103, 4294901760
    %v753 = vsub.f32 %v103, %v752
    %754 = vmatmul.f32.gmra.mxu0 %v753
    %v755 = vpop.f32.mrf.mxu0
    %v756 = vadd.f32 %v572, %v755
    %v757 = vand.u32 %v106, 4294901760
    %v758 = vsub.f32 %v106, %v757
    %759 = vmatmul.f32.gmra.mxu0 %v758
    %v760 = vpop.f32.mrf.mxu0
    %v761 = vadd.f32 %v576, %v760
    %v762 = vand.u32 %v109, 4294901760
    %v763 = vsub.f32 %v109, %v762
    %764 = vmatmul.f32.gmra.mxu0 %v763
    %v765 = vpop.f32.mrf.mxu0
    %v766 = vadd.f32 %v580, %v765
    %v767 = vand.u32 %v112, 4294901760
    %v768 = vsub.f32 %v112, %v767
    %769 = vmatmul.f32.gmra.mxu0 %v768
    %v770 = vpop.f32.mrf.mxu0
    %v771 = vadd.f32 %v584, %v770
    %v772 = vand.u32 %v115, 4294901760
    %v773 = vsub.f32 %v115, %v772
    %774 = vmatmul.f32.gmra.mxu0 %v773
    %v775 = vpop.f32.mrf.mxu0
    %v776 = vadd.f32 %v588, %v775
    %v777 = vand.u32 %v118, 4294901760
    %v778 = vsub.f32 %v118, %v777
    %779 = vmatmul.f32.gmra.mxu0 %v778
    %v780 = vpop.f32.mrf.mxu0
    %v781 = vadd.f32 %v592, %v780
    %v782 = vand.u32 %v121, 4294901760
    %v783 = vsub.f32 %v121, %v782
    %784 = vmatmul.f32.gmra.mxu0 %v783
    %v785 = vpop.f32.mrf.mxu0
    %v786 = vadd.f32 %v596, %v785
    %v787 = vand.u32 %v124, 4294901760
    %v788 = vsub.f32 %v124, %v787
    %789 = vmatmul.f32.gmra.mxu0 %v788
    %v790 = vpop.f32.mrf.mxu0
    %v791 = vadd.f32 %v600, %v790
    %v792 = vand.u32 %v127, 4294901760
    %v793 = vsub.f32 %v127, %v792
    %794 = vmatmul.f32.gmra.mxu0 %v793
    %v795 = vpop.f32.mrf.mxu0
    %v796 = vadd.f32 %v604, %v795
    %v797 = vand.u32 %v130, 4294901760
    %v798 = vsub.f32 %v130, %v797
    %799 = vmatmul.f32.gmra.mxu0 %v798
    %v800 = vpop.f32.mrf.mxu0
    %v801 = vadd.f32 %v608, %v800
    %v802 = vand.u32 %v133, 4294901760
    %v803 = vsub.f32 %v133, %v802
    %804 = vmatmul.f32.gmra.mxu0 %v803
    %v805 = vpop.f32.mrf.mxu0
    %v806 = vadd.f32 %v612, %v805
    %v807 = vand.u32 %v136, 4294901760
    %v808 = vsub.f32 %v136, %v807
    %809 = vmatmul.f32.gmra.mxu0 %v808
    %v810 = vpop.f32.mrf.mxu0
    %v811 = vadd.f32 %v616, %v810
    %v812 = vand.u32 %v139, 4294901760
    %v813 = vsub.f32 %v139, %v812
    %814 = vmatmul.f32.gmra.mxu0 %v813
    %v815 = vpop.f32.mrf.mxu0
    %v816 = vadd.f32 %v620, %v815
    %v817 = vand.u32 %v142, 4294901760
    %v818 = vsub.f32 %v142, %v817
    %819 = vmatmul.f32.gmra.mxu0 %v818
    %v820 = vpop.f32.mrf.mxu0
    %v821 = vadd.f32 %v624, %v820
    %v822 = vand.u32 %v145, 4294901760
    %v823 = vsub.f32 %v145, %v822
    %824 = vmatmul.f32.gmra.mxu0 %v823
    %v825 = vpop.f32.mrf.mxu0
    %v826 = vadd.f32 %v628, %v825
    %v827 = vand.u32 %v148, 4294901760
    %v828 = vsub.f32 %v148, %v827
    %829 = vmatmul.f32.gmra.mxu0 %v828
    %v830 = vpop.f32.mrf.mxu0
    %v831 = vadd.f32 %v632, %v830
    %v832 = vand.u32 %v151, 4294901760
    %v833 = vsub.f32 %v151, %v832
    %834 = vmatmul.f32.gmra.mxu0 %v833
    %v835 = vpop.f32.mrf.mxu0
    %v836 = vadd.f32 %v636, %v835
    %v837 = vand.u32 %v154, 4294901760
    %v838 = vsub.f32 %v154, %v837
    %839 = vmatmul.f32.gmra.mxu0 %v838
    %v840 = vpop.f32.mrf.mxu0
    %v841 = vadd.f32 %v640, %v840
    %v842 = vand.u32 %v157, 4294901760
    %v843 = vsub.f32 %v157, %v842
    %844 = vmatmul.f32.gmra.mxu0 %v843
    %v845 = vpop.f32.mrf.mxu0
    %v846 = vadd.f32 %v644, %v845
    %v847 = vand.u32 %v160, 4294901760
    %v848 = vsub.f32 %v160, %v847
    %849 = vmatmul.f32.gmra.mxu0 %v848
    %v850 = vpop.f32.mrf.mxu0
    %v851 = vadd.f32 %v648, %v850
    %v852 = vand.u32 %v163, 4294901760
    %v853 = vsub.f32 %v163, %v852
    %854 = vmatmul.f32.gmra.mxu0 %v853
    %v855 = vpop.f32.mrf.mxu0
    %v856 = vadd.f32 %v652, %v855
    %v857 = vand.u32 %v166, 4294901760
    %v858 = vsub.f32 %v166, %v857
    %859 = vmatmul.f32.gmra.mxu0 %v858
    %v860 = vpop.f32.mrf.mxu0
    %v861 = vadd.f32 %v656, %v860
    %862 = vdwg.mxu0
    %863 = vmatpush.msra.mxu0 0.0
    %864 = vmatpush.msra.mxu0 0.0
    %865 = vmatpush.msra.mxu0 0.0
    %866 = vmatpush.msra.mxu0 0.0
    %867 = vmatpush.msra.mxu0 0.0
    %868 = vmatpush.msra.mxu0 0.0
    %869 = vmatpush.msra.mxu0 0.0
    %870 = vmatpush.msra.mxu0 0.0
    %871 = vmatpush.msra.mxu0 0.0
    %872 = vmatpush.msra.mxu0 0.0
    %873 = vmatpush.msra.mxu0 0.0
    %874 = vmatpush.msra.mxu0 0.0
    %v875 = vand.u32 %v54, 4294901760
    %876 = vmatpush.msra.mxu0 %v875
    %v877 = vand.u32 %v53, 4294901760
    %878 = vmatpush.msra.mxu0 %v877
    %v879 = vand.u32 %v52, 4294901760
    %880 = vmatpush.msra.mxu0 %v879
    %v881 = vand.u32 %v51, 4294901760
    %882 = vmatpush.msra.mxu0 %v881
    %v883 = vand.u32 %v61, 4294901760
    %v884 = vsub.f32 %v61, %v883
    %v885 = vand.u32 %v884, 4294901760
    %886 = vmatmul.f32.gmra.mxu0 %v885
    %v887 = vpop.f32.mrf.mxu0
    %v888 = vadd.f32 %v686, %v887
    %v889 = vand.u32 %v64, 4294901760
    %v890 = vsub.f32 %v64, %v889
    %v891 = vand.u32 %v890, 4294901760
    %892 = vmatmul.f32.gmra.mxu0 %v891
    %v893 = vpop.f32.mrf.mxu0
    %v894 = vadd.f32 %v691, %v893
    %v895 = vand.u32 %v67, 4294901760
    %v896 = vsub.f32 %v67, %v895
    %v897 = vand.u32 %v896, 4294901760
    %898 = vmatmul.f32.gmra.mxu0 %v897
    %v899 = vpop.f32.mrf.mxu0
    %v900 = vadd.f32 %v696, %v899
    %v901 = vand.u32 %v70, 4294901760
    %v902 = vsub.f32 %v70, %v901
    %v903 = vand.u32 %v902, 4294901760
    %904 = vmatmul.f32.gmra.mxu0 %v903
    %v905 = vpop.f32.mrf.mxu0
    %v906 = vadd.f32 %v701, %v905
    %v907 = vand.u32 %v73, 4294901760
    %v908 = vsub.f32 %v73, %v907
    %v909 = vand.u32 %v908, 4294901760
    %910 = vmatmul.f32.gmra.mxu0 %v909
    %v911 = vpop.f32.mrf.mxu0
    %v912 = vadd.f32 %v706, %v911
    %v913 = vand.u32 %v76, 4294901760
    %v914 = vsub.f32 %v76, %v913
    %v915 = vand.u32 %v914, 4294901760
    %916 = vmatmul.f32.gmra.mxu0 %v915
    %v917 = vpop.f32.mrf.mxu0
    %v918 = vadd.f32 %v711, %v917
    %v919 = vand.u32 %v79, 4294901760
    %v920 = vsub.f32 %v79, %v919
    %v921 = vand.u32 %v920, 4294901760
    %922 = vmatmul.f32.gmra.mxu0 %v921
    %v923 = vpop.f32.mrf.mxu0
    %v924 = vadd.f32 %v716, %v923
    %v925 = vand.u32 %v82, 4294901760
    %v926 = vsub.f32 %v82, %v925
    %v927 = vand.u32 %v926, 4294901760
    %928 = vmatmul.f32.gmra.mxu0 %v927
    %v929 = vpop.f32.mrf.mxu0
    %v930 = vadd.f32 %v721, %v929
    %v931 = vand.u32 %v85, 4294901760
    %v932 = vsub.f32 %v85, %v931
    %v933 = vand.u32 %v932, 4294901760
    %934 = vmatmul.f32.gmra.mxu0 %v933
    %v935 = vpop.f32.mrf.mxu0
    %v936 = vadd.f32 %v726, %v935
    %v937 = vand.u32 %v88, 4294901760
    %v938 = vsub.f32 %v88, %v937
    %v939 = vand.u32 %v938, 4294901760
    %940 = vmatmul.f32.gmra.mxu0 %v939
    %v941 = vpop.f32.mrf.mxu0
    %v942 = vadd.f32 %v731, %v941
    %v943 = vand.u32 %v91, 4294901760
    %v944 = vsub.f32 %v91, %v943
    %v945 = vand.u32 %v944, 4294901760
    %946 = vmatmul.f32.gmra.mxu0 %v945
    %v947 = vpop.f32.mrf.mxu0
    %v948 = vadd.f32 %v736, %v947
    %v949 = vand.u32 %v94, 4294901760
    %v950 = vsub.f32 %v94, %v949
    %v951 = vand.u32 %v950, 4294901760
    %952 = vmatmul.f32.gmra.mxu0 %v951
    %v953 = vpop.f32.mrf.mxu0
    %v954 = vadd.f32 %v741, %v953
    %v955 = vand.u32 %v97, 4294901760
    %v956 = vsub.f32 %v97, %v955
    %v957 = vand.u32 %v956, 4294901760
    %958 = vmatmul.f32.gmra.mxu0 %v957
    %v959 = vpop.f32.mrf.mxu0
    %v960 = vadd.f32 %v746, %v959
    %v961 = vand.u32 %v100, 4294901760
    %v962 = vsub.f32 %v100, %v961
    %v963 = vand.u32 %v962, 4294901760
    %964 = vmatmul.f32.gmra.mxu0 %v963
    %v965 = vpop.f32.mrf.mxu0
    %v966 = vadd.f32 %v751, %v965
    %v967 = vand.u32 %v103, 4294901760
    %v968 = vsub.f32 %v103, %v967
    %v969 = vand.u32 %v968, 4294901760
    %970 = vmatmul.f32.gmra.mxu0 %v969
    %v971 = vpop.f32.mrf.mxu0
    %v972 = vadd.f32 %v756, %v971
    %v973 = vand.u32 %v106, 4294901760
    %v974 = vsub.f32 %v106, %v973
    %v975 = vand.u32 %v974, 4294901760
    %976 = vmatmul.f32.gmra.mxu0 %v975
    %v977 = vpop.f32.mrf.mxu0
    %v978 = vadd.f32 %v761, %v977
    %v979 = vand.u32 %v109, 4294901760
    %v980 = vsub.f32 %v109, %v979
    %v981 = vand.u32 %v980, 4294901760
    %982 = vmatmul.f32.gmra.mxu0 %v981
    %v983 = vpop.f32.mrf.mxu0
    %v984 = vadd.f32 %v766, %v983
    %v985 = vand.u32 %v112, 4294901760
    %v986 = vsub.f32 %v112, %v985
    %v987 = vand.u32 %v986, 4294901760
    %988 = vmatmul.f32.gmra.mxu0 %v987
    %v989 = vpop.f32.mrf.mxu0
    %v990 = vadd.f32 %v771, %v989
    %v991 = vand.u32 %v115, 4294901760
    %v992 = vsub.f32 %v115, %v991
    %v993 = vand.u32 %v992, 4294901760
    %994 = vmatmul.f32.gmra.mxu0 %v993
    %v995 = vpop.f32.mrf.mxu0
    %v996 = vadd.f32 %v776, %v995
    %v997 = vand.u32 %v118, 4294901760
    %v998 = vsub.f32 %v118, %v997
    %v999 = vand.u32 %v998, 4294901760
    %1000 = vmatmul.f32.gmra.mxu0 %v999
    %v1001 = vpop.f32.mrf.mxu0
    %v1002 = vadd.f32 %v781, %v1001
    %v1003 = vand.u32 %v121, 4294901760
    %v1004 = vsub.f32 %v121, %v1003
    %v1005 = vand.u32 %v1004, 4294901760
    %1006 = vmatmul.f32.gmra.mxu0 %v1005
    %v1007 = vpop.f32.mrf.mxu0
    %v1008 = vadd.f32 %v786, %v1007
    %v1009 = vand.u32 %v124, 4294901760
    %v1010 = vsub.f32 %v124, %v1009
    %v1011 = vand.u32 %v1010, 4294901760
    %1012 = vmatmul.f32.gmra.mxu0 %v1011
    %v1013 = vpop.f32.mrf.mxu0
    %v1014 = vadd.f32 %v791, %v1013
    %v1015 = vand.u32 %v127, 4294901760
    %v1016 = vsub.f32 %v127, %v1015
    %v1017 = vand.u32 %v1016, 4294901760
    %1018 = vmatmul.f32.gmra.mxu0 %v1017
    %v1019 = vpop.f32.mrf.mxu0
    %v1020 = vadd.f32 %v796, %v1019
    %v1021 = vand.u32 %v130, 4294901760
    %v1022 = vsub.f32 %v130, %v1021
    %v1023 = vand.u32 %v1022, 4294901760
    %1024 = vmatmul.f32.gmra.mxu0 %v1023
    %v1025 = vpop.f32.mrf.mxu0
    %v1026 = vadd.f32 %v801, %v1025
    %v1027 = vand.u32 %v133, 4294901760
    %v1028 = vsub.f32 %v133, %v1027
    %v1029 = vand.u32 %v1028, 4294901760
    %1030 = vmatmul.f32.gmra.mxu0 %v1029
    %v1031 = vpop.f32.mrf.mxu0
    %v1032 = vadd.f32 %v806, %v1031
    %v1033 = vand.u32 %v136, 4294901760
    %v1034 = vsub.f32 %v136, %v1033
    %v1035 = vand.u32 %v1034, 4294901760
    %1036 = vmatmul.f32.gmra.mxu0 %v1035
    %v1037 = vpop.f32.mrf.mxu0
    %v1038 = vadd.f32 %v811, %v1037
    %v1039 = vand.u32 %v139, 4294901760
    %v1040 = vsub.f32 %v139, %v1039
    %v1041 = vand.u32 %v1040, 4294901760
    %1042 = vmatmul.f32.gmra.mxu0 %v1041
    %v1043 = vpop.f32.mrf.mxu0
    %v1044 = vadd.f32 %v816, %v1043
    %v1045 = vand.u32 %v142, 4294901760
    %v1046 = vsub.f32 %v142, %v1045
    %v1047 = vand.u32 %v1046, 4294901760
    %1048 = vmatmul.f32.gmra.mxu0 %v1047
    %v1049 = vpop.f32.mrf.mxu0
    %v1050 = vadd.f32 %v821, %v1049
    %v1051 = vand.u32 %v145, 4294901760
    %v1052 = vsub.f32 %v145, %v1051
    %v1053 = vand.u32 %v1052, 4294901760
    %1054 = vmatmul.f32.gmra.mxu0 %v1053
    %v1055 = vpop.f32.mrf.mxu0
    %v1056 = vadd.f32 %v826, %v1055
    %v1057 = vand.u32 %v148, 4294901760
    %v1058 = vsub.f32 %v148, %v1057
    %v1059 = vand.u32 %v1058, 4294901760
    %1060 = vmatmul.f32.gmra.mxu0 %v1059
    %v1061 = vpop.f32.mrf.mxu0
    %v1062 = vadd.f32 %v831, %v1061
    %v1063 = vand.u32 %v151, 4294901760
    %v1064 = vsub.f32 %v151, %v1063
    %v1065 = vand.u32 %v1064, 4294901760
    %1066 = vmatmul.f32.gmra.mxu0 %v1065
    %v1067 = vpop.f32.mrf.mxu0
    %v1068 = vadd.f32 %v836, %v1067
    %v1069 = vand.u32 %v154, 4294901760
    %v1070 = vsub.f32 %v154, %v1069
    %v1071 = vand.u32 %v1070, 4294901760
    %1072 = vmatmul.f32.gmra.mxu0 %v1071
    %v1073 = vpop.f32.mrf.mxu0
    %v1074 = vadd.f32 %v841, %v1073
    %v1075 = vand.u32 %v157, 4294901760
    %v1076 = vsub.f32 %v157, %v1075
    %v1077 = vand.u32 %v1076, 4294901760
    %1078 = vmatmul.f32.gmra.mxu0 %v1077
    %v1079 = vpop.f32.mrf.mxu0
    %v1080 = vadd.f32 %v846, %v1079
    %v1081 = vand.u32 %v160, 4294901760
    %v1082 = vsub.f32 %v160, %v1081
    %v1083 = vand.u32 %v1082, 4294901760
    %1084 = vmatmul.f32.gmra.mxu0 %v1083
    %v1085 = vpop.f32.mrf.mxu0
    %v1086 = vadd.f32 %v851, %v1085
    %v1087 = vand.u32 %v163, 4294901760
    %v1088 = vsub.f32 %v163, %v1087
    %v1089 = vand.u32 %v1088, 4294901760
    %1090 = vmatmul.f32.gmra.mxu0 %v1089
    %v1091 = vpop.f32.mrf.mxu0
    %v1092 = vadd.f32 %v856, %v1091
    %v1093 = vand.u32 %v166, 4294901760
    %v1094 = vsub.f32 %v166, %v1093
    %v1095 = vand.u32 %v1094, 4294901760
    %1096 = vmatmul.f32.gmra.mxu0 %v1095
    %v1097 = vpop.f32.mrf.mxu0
    %v1098 = vadd.f32 %v861, %v1097
    %1099 = vdwg.mxu0
    %1100 = vmatpush.msra.mxu0 0.0
    %1101 = vmatpush.msra.mxu0 0.0
    %1102 = vmatpush.msra.mxu0 0.0
    %1103 = vmatpush.msra.mxu0 0.0
    %1104 = vmatpush.msra.mxu0 0.0
    %1105 = vmatpush.msra.mxu0 0.0
    %1106 = vmatpush.msra.mxu0 0.0
    %1107 = vmatpush.msra.mxu0 0.0
    %1108 = vmatpush.msra.mxu0 0.0
    %1109 = vmatpush.msra.mxu0 0.0
    %1110 = vmatpush.msra.mxu0 0.0
    %1111 = vmatpush.msra.mxu0 0.0
    %v1112 = vand.u32 %v54, 4294901760
    %v1113 = vsub.f32 %v54, %v1112
    %v1114 = vand.u32 %v1113, 4294901760
    %1115 = vmatpush.msra.mxu0 %v1114
    %v1116 = vand.u32 %v53, 4294901760
    %v1117 = vsub.f32 %v53, %v1116
    %v1118 = vand.u32 %v1117, 4294901760
    %1119 = vmatpush.msra.mxu0 %v1118
    %v1120 = vand.u32 %v52, 4294901760
    %v1121 = vsub.f32 %v52, %v1120
    %v1122 = vand.u32 %v1121, 4294901760
    %1123 = vmatpush.msra.mxu0 %v1122
    %v1124 = vand.u32 %v51, 4294901760
    %v1125 = vsub.f32 %v51, %v1124
    %v1126 = vand.u32 %v1125, 4294901760
    %1127 = vmatpush.msra.mxu0 %v1126
    %v1128 = vand.u32 %v61, 4294901760
    %1129 = vmatmul.f32.gmra.mxu0 %v1128
    %v1130 = vpop.f32.mrf.mxu0
    %v1131 = vadd.f32 %v888, %v1130
    %v1132 = vand.u32 %v64, 4294901760
    %1133 = vmatmul.f32.gmra.mxu0 %v1132
    %v1134 = vpop.f32.mrf.mxu0
    %v1135 = vadd.f32 %v894, %v1134
    %v1136 = vand.u32 %v67, 4294901760
    %1137 = vmatmul.f32.gmra.mxu0 %v1136
    %v1138 = vpop.f32.mrf.mxu0
    %v1139 = vadd.f32 %v900, %v1138
    %v1140 = vand.u32 %v70, 4294901760
    %1141 = vmatmul.f32.gmra.mxu0 %v1140
    %v1142 = vpop.f32.mrf.mxu0
    %v1143 = vadd.f32 %v906, %v1142
    %v1144 = vand.u32 %v73, 4294901760
    %1145 = vmatmul.f32.gmra.mxu0 %v1144
    %v1146 = vpop.f32.mrf.mxu0
    %v1147 = vadd.f32 %v912, %v1146
    %v1148 = vand.u32 %v76, 4294901760
    %1149 = vmatmul.f32.gmra.mxu0 %v1148
    %v1150 = vpop.f32.mrf.mxu0
    %v1151 = vadd.f32 %v918, %v1150
    %v1152 = vand.u32 %v79, 4294901760
    %1153 = vmatmul.f32.gmra.mxu0 %v1152
    %v1154 = vpop.f32.mrf.mxu0
    %v1155 = vadd.f32 %v924, %v1154
    %v1156 = vand.u32 %v82, 4294901760
    %1157 = vmatmul.f32.gmra.mxu0 %v1156
    %v1158 = vpop.f32.mrf.mxu0
    %v1159 = vadd.f32 %v930, %v1158
    %v1160 = vand.u32 %v85, 4294901760
    %1161 = vmatmul.f32.gmra.mxu0 %v1160
    %v1162 = vpop.f32.mrf.mxu0
    %v1163 = vadd.f32 %v936, %v1162
    %v1164 = vand.u32 %v88, 4294901760
    %1165 = vmatmul.f32.gmra.mxu0 %v1164
    %v1166 = vpop.f32.mrf.mxu0
    %v1167 = vadd.f32 %v942, %v1166
    %v1168 = vand.u32 %v91, 4294901760
    %1169 = vmatmul.f32.gmra.mxu0 %v1168
    %v1170 = vpop.f32.mrf.mxu0
    %v1171 = vadd.f32 %v948, %v1170
    %v1172 = vand.u32 %v94, 4294901760
    %1173 = vmatmul.f32.gmra.mxu0 %v1172
    %v1174 = vpop.f32.mrf.mxu0
    %v1175 = vadd.f32 %v954, %v1174
    %v1176 = vand.u32 %v97, 4294901760
    %1177 = vmatmul.f32.gmra.mxu0 %v1176
    %v1178 = vpop.f32.mrf.mxu0
    %v1179 = vadd.f32 %v960, %v1178
    %v1180 = vand.u32 %v100, 4294901760
    %1181 = vmatmul.f32.gmra.mxu0 %v1180
    %v1182 = vpop.f32.mrf.mxu0
    %v1183 = vadd.f32 %v966, %v1182
    %v1184 = vand.u32 %v103, 4294901760
    %1185 = vmatmul.f32.gmra.mxu0 %v1184
    %v1186 = vpop.f32.mrf.mxu0
    %v1187 = vadd.f32 %v972, %v1186
    %v1188 = vand.u32 %v106, 4294901760
    %1189 = vmatmul.f32.gmra.mxu0 %v1188
    %v1190 = vpop.f32.mrf.mxu0
    %v1191 = vadd.f32 %v978, %v1190
    %v1192 = vand.u32 %v109, 4294901760
    %1193 = vmatmul.f32.gmra.mxu0 %v1192
    %v1194 = vpop.f32.mrf.mxu0
    %v1195 = vadd.f32 %v984, %v1194
    %v1196 = vand.u32 %v112, 4294901760
    %1197 = vmatmul.f32.gmra.mxu0 %v1196
    %v1198 = vpop.f32.mrf.mxu0
    %v1199 = vadd.f32 %v990, %v1198
    %v1200 = vand.u32 %v115, 4294901760
    %1201 = vmatmul.f32.gmra.mxu0 %v1200
    %v1202 = vpop.f32.mrf.mxu0
    %v1203 = vadd.f32 %v996, %v1202
    %v1204 = vand.u32 %v118, 4294901760
    %1205 = vmatmul.f32.gmra.mxu0 %v1204
    %v1206 = vpop.f32.mrf.mxu0
    %v1207 = vadd.f32 %v1002, %v1206
    %v1208 = vand.u32 %v121, 4294901760
    %1209 = vmatmul.f32.gmra.mxu0 %v1208
    %v1210 = vpop.f32.mrf.mxu0
    %v1211 = vadd.f32 %v1008, %v1210
    %v1212 = vand.u32 %v124, 4294901760
    %1213 = vmatmul.f32.gmra.mxu0 %v1212
    %v1214 = vpop.f32.mrf.mxu0
    %v1215 = vadd.f32 %v1014, %v1214
    %v1216 = vand.u32 %v127, 4294901760
    %1217 = vmatmul.f32.gmra.mxu0 %v1216
    %v1218 = vpop.f32.mrf.mxu0
    %v1219 = vadd.f32 %v1020, %v1218
    %v1220 = vand.u32 %v130, 4294901760
    %1221 = vmatmul.f32.gmra.mxu0 %v1220
    %v1222 = vpop.f32.mrf.mxu0
    %v1223 = vadd.f32 %v1026, %v1222
    %v1224 = vand.u32 %v133, 4294901760
    %1225 = vmatmul.f32.gmra.mxu0 %v1224
    %v1226 = vpop.f32.mrf.mxu0
    %v1227 = vadd.f32 %v1032, %v1226
    %v1228 = vand.u32 %v136, 4294901760
    %1229 = vmatmul.f32.gmra.mxu0 %v1228
    %v1230 = vpop.f32.mrf.mxu0
    %v1231 = vadd.f32 %v1038, %v1230
    %v1232 = vand.u32 %v139, 4294901760
    %1233 = vmatmul.f32.gmra.mxu0 %v1232
    %v1234 = vpop.f32.mrf.mxu0
    %v1235 = vadd.f32 %v1044, %v1234
    %v1236 = vand.u32 %v142, 4294901760
    %1237 = vmatmul.f32.gmra.mxu0 %v1236
    %v1238 = vpop.f32.mrf.mxu0
    %v1239 = vadd.f32 %v1050, %v1238
    %v1240 = vand.u32 %v145, 4294901760
    %1241 = vmatmul.f32.gmra.mxu0 %v1240
    %v1242 = vpop.f32.mrf.mxu0
    %v1243 = vadd.f32 %v1056, %v1242
    %v1244 = vand.u32 %v148, 4294901760
    %1245 = vmatmul.f32.gmra.mxu0 %v1244
    %v1246 = vpop.f32.mrf.mxu0
    %v1247 = vadd.f32 %v1062, %v1246
    %v1248 = vand.u32 %v151, 4294901760
    %1249 = vmatmul.f32.gmra.mxu0 %v1248
    %v1250 = vpop.f32.mrf.mxu0
    %v1251 = vadd.f32 %v1068, %v1250
    %v1252 = vand.u32 %v154, 4294901760
    %1253 = vmatmul.f32.gmra.mxu0 %v1252
    %v1254 = vpop.f32.mrf.mxu0
    %v1255 = vadd.f32 %v1074, %v1254
    %v1256 = vand.u32 %v157, 4294901760
    %1257 = vmatmul.f32.gmra.mxu0 %v1256
    %v1258 = vpop.f32.mrf.mxu0
    %v1259 = vadd.f32 %v1080, %v1258
    %v1260 = vand.u32 %v160, 4294901760
    %1261 = vmatmul.f32.gmra.mxu0 %v1260
    %v1262 = vpop.f32.mrf.mxu0
    %v1263 = vadd.f32 %v1086, %v1262
    %v1264 = vand.u32 %v163, 4294901760
    %1265 = vmatmul.f32.gmra.mxu0 %v1264
    %v1266 = vpop.f32.mrf.mxu0
    %v1267 = vadd.f32 %v1092, %v1266
    %v1268 = vand.u32 %v166, 4294901760
    %1269 = vmatmul.f32.gmra.mxu0 %v1268
    %v1270 = vpop.f32.mrf.mxu0
    %v1271 = vadd.f32 %v1098, %v1270
    %1272 = vdwg.mxu0
    %1273 = vmatpush.msra.mxu0 0.0
    %1274 = vmatpush.msra.mxu0 0.0
    %1275 = vmatpush.msra.mxu0 0.0
    %1276 = vmatpush.msra.mxu0 0.0
    %1277 = vmatpush.msra.mxu0 0.0
    %1278 = vmatpush.msra.mxu0 0.0
    %1279 = vmatpush.msra.mxu0 0.0
    %1280 = vmatpush.msra.mxu0 0.0
    %1281 = vmatpush.msra.mxu0 0.0
    %1282 = vmatpush.msra.mxu0 0.0
    %1283 = vmatpush.msra.mxu0 0.0
    %1284 = vmatpush.msra.mxu0 0.0
    %v1285 = vand.u32 %v54, 4294901760
    %1286 = vmatpush.msra.mxu0 %v1285
    %v1287 = vand.u32 %v53, 4294901760
    %1288 = vmatpush.msra.mxu0 %v1287
    %v1289 = vand.u32 %v52, 4294901760
    %1290 = vmatpush.msra.mxu0 %v1289
    %v1291 = vand.u32 %v51, 4294901760
    %1292 = vmatpush.msra.mxu0 %v1291
    %v1293 = vand.u32 %v61, 4294901760
    %1294 = vmatmul.f32.gmra.mxu0 %v1293
    %v1295 = vpop.f32.mrf.mxu0
    %v1296 = vadd.f32 %v1131, %v1295
    %v1297 = vand.u32 %v64, 4294901760
    %1298 = vmatmul.f32.gmra.mxu0 %v1297
    %v1299 = vpop.f32.mrf.mxu0
    %v1300 = vadd.f32 %v1135, %v1299
    %v1301 = vand.u32 %v67, 4294901760
    %1302 = vmatmul.f32.gmra.mxu0 %v1301
    %v1303 = vpop.f32.mrf.mxu0
    %v1304 = vadd.f32 %v1139, %v1303
    %v1305 = vand.u32 %v70, 4294901760
    %1306 = vmatmul.f32.gmra.mxu0 %v1305
    %v1307 = vpop.f32.mrf.mxu0
    %v1308 = vadd.f32 %v1143, %v1307
    %v1309 = vand.u32 %v73, 4294901760
    %1310 = vmatmul.f32.gmra.mxu0 %v1309
    %v1311 = vpop.f32.mrf.mxu0
    %v1312 = vadd.f32 %v1147, %v1311
    %v1313 = vand.u32 %v76, 4294901760
    %1314 = vmatmul.f32.gmra.mxu0 %v1313
    %v1315 = vpop.f32.mrf.mxu0
    %v1316 = vadd.f32 %v1151, %v1315
    %v1317 = vand.u32 %v79, 4294901760
    %1318 = vmatmul.f32.gmra.mxu0 %v1317
    %v1319 = vpop.f32.mrf.mxu0
    %v1320 = vadd.f32 %v1155, %v1319
    %v1321 = vand.u32 %v82, 4294901760
    %1322 = vmatmul.f32.gmra.mxu0 %v1321
    %v1323 = vpop.f32.mrf.mxu0
    %v1324 = vadd.f32 %v1159, %v1323
    %v1325 = vand.u32 %v85, 4294901760
    %1326 = vmatmul.f32.gmra.mxu0 %v1325
    %v1327 = vpop.f32.mrf.mxu0
    %v1328 = vadd.f32 %v1163, %v1327
    %v1329 = vand.u32 %v88, 4294901760
    %1330 = vmatmul.f32.gmra.mxu0 %v1329
    %v1331 = vpop.f32.mrf.mxu0
    %v1332 = vadd.f32 %v1167, %v1331
    %v1333 = vand.u32 %v91, 4294901760
    %1334 = vmatmul.f32.gmra.mxu0 %v1333
    %v1335 = vpop.f32.mrf.mxu0
    %v1336 = vadd.f32 %v1171, %v1335
    %v1337 = vand.u32 %v94, 4294901760
    %1338 = vmatmul.f32.gmra.mxu0 %v1337
    %v1339 = vpop.f32.mrf.mxu0
    %v1340 = vadd.f32 %v1175, %v1339
    %v1341 = vand.u32 %v97, 4294901760
    %1342 = vmatmul.f32.gmra.mxu0 %v1341
    %v1343 = vpop.f32.mrf.mxu0
    %v1344 = vadd.f32 %v1179, %v1343
    %v1345 = vand.u32 %v100, 4294901760
    %1346 = vmatmul.f32.gmra.mxu0 %v1345
    %v1347 = vpop.f32.mrf.mxu0
    %v1348 = vadd.f32 %v1183, %v1347
    %v1349 = vand.u32 %v103, 4294901760
    %1350 = vmatmul.f32.gmra.mxu0 %v1349
    %v1351 = vpop.f32.mrf.mxu0
    %v1352 = vadd.f32 %v1187, %v1351
    %v1353 = vand.u32 %v106, 4294901760
    %1354 = vmatmul.f32.gmra.mxu0 %v1353
    %v1355 = vpop.f32.mrf.mxu0
    %v1356 = vadd.f32 %v1191, %v1355
    %v1357 = vand.u32 %v109, 4294901760
    %1358 = vmatmul.f32.gmra.mxu0 %v1357
    %v1359 = vpop.f32.mrf.mxu0
    %v1360 = vadd.f32 %v1195, %v1359
    %v1361 = vand.u32 %v112, 4294901760
    %1362 = vmatmul.f32.gmra.mxu0 %v1361
    %v1363 = vpop.f32.mrf.mxu0
    %v1364 = vadd.f32 %v1199, %v1363
    %v1365 = vand.u32 %v115, 4294901760
    %1366 = vmatmul.f32.gmra.mxu0 %v1365
    %v1367 = vpop.f32.mrf.mxu0
    %v1368 = vadd.f32 %v1203, %v1367
    %v1369 = vand.u32 %v118, 4294901760
    %1370 = vmatmul.f32.gmra.mxu0 %v1369
    %v1371 = vpop.f32.mrf.mxu0
    %v1372 = vadd.f32 %v1207, %v1371
    %v1373 = vand.u32 %v121, 4294901760
    %1374 = vmatmul.f32.gmra.mxu0 %v1373
    %v1375 = vpop.f32.mrf.mxu0
    %v1376 = vadd.f32 %v1211, %v1375
    %v1377 = vand.u32 %v124, 4294901760
    %1378 = vmatmul.f32.gmra.mxu0 %v1377
    %v1379 = vpop.f32.mrf.mxu0
    %v1380 = vadd.f32 %v1215, %v1379
    %v1381 = vand.u32 %v127, 4294901760
    %1382 = vmatmul.f32.gmra.mxu0 %v1381
    %v1383 = vpop.f32.mrf.mxu0
    %v1384 = vadd.f32 %v1219, %v1383
    %v1385 = vand.u32 %v130, 4294901760
    %1386 = vmatmul.f32.gmra.mxu0 %v1385
    %v1387 = vpop.f32.mrf.mxu0
    %v1388 = vadd.f32 %v1223, %v1387
    %v1389 = vand.u32 %v133, 4294901760
    %1390 = vmatmul.f32.gmra.mxu0 %v1389
    %v1391 = vpop.f32.mrf.mxu0
    %v1392 = vadd.f32 %v1227, %v1391
    %v1393 = vand.u32 %v136, 4294901760
    %1394 = vmatmul.f32.gmra.mxu0 %v1393
    %v1395 = vpop.f32.mrf.mxu0
    %v1396 = vadd.f32 %v1231, %v1395
    %v1397 = vand.u32 %v139, 4294901760
    %1398 = vmatmul.f32.gmra.mxu0 %v1397
    %v1399 = vpop.f32.mrf.mxu0
    %v1400 = vadd.f32 %v1235, %v1399
    %v1401 = vand.u32 %v142, 4294901760
    %1402 = vmatmul.f32.gmra.mxu0 %v1401
    %v1403 = vpop.f32.mrf.mxu0
    %v1404 = vadd.f32 %v1239, %v1403
    %v1405 = vand.u32 %v145, 4294901760
    %1406 = vmatmul.f32.gmra.mxu0 %v1405
    %v1407 = vpop.f32.mrf.mxu0
    %v1408 = vadd.f32 %v1243, %v1407
    %v1409 = vand.u32 %v148, 4294901760
    %1410 = vmatmul.f32.gmra.mxu0 %v1409
    %v1411 = vpop.f32.mrf.mxu0
    %v1412 = vadd.f32 %v1247, %v1411
    %v1413 = vand.u32 %v151, 4294901760
    %1414 = vmatmul.f32.gmra.mxu0 %v1413
    %v1415 = vpop.f32.mrf.mxu0
    %v1416 = vadd.f32 %v1251, %v1415
    %v1417 = vand.u32 %v154, 4294901760
    %1418 = vmatmul.f32.gmra.mxu0 %v1417
    %v1419 = vpop.f32.mrf.mxu0
    %v1420 = vadd.f32 %v1255, %v1419
    %v1421 = vand.u32 %v157, 4294901760
    %1422 = vmatmul.f32.gmra.mxu0 %v1421
    %v1423 = vpop.f32.mrf.mxu0
    %v1424 = vadd.f32 %v1259, %v1423
    %v1425 = vand.u32 %v160, 4294901760
    %1426 = vmatmul.f32.gmra.mxu0 %v1425
    %v1427 = vpop.f32.mrf.mxu0
    %v1428 = vadd.f32 %v1263, %v1427
    %v1429 = vand.u32 %v163, 4294901760
    %1430 = vmatmul.f32.gmra.mxu0 %v1429
    %v1431 = vpop.f32.mrf.mxu0
    %v1432 = vadd.f32 %v1267, %v1431
    %v1433 = vand.u32 %v166, 4294901760
    %1434 = vmatmul.f32.gmra.mxu0 %v1433
    %v1435 = vpop.f32.mrf.mxu0
    %v1436 = vadd.f32 %v1271, %v1435
    %1437 = vdwg.mxu0
    %v1439 = vsel %vm59, %v1296, 0
    %v1442 = vsel %vm59, %v1300, 0
    %v1445 = vsel %vm59, %v1312, 0
    %v1448 = vsel %vm59, %v1316, 0
    %v1451 = vsel %vm59, %v1320, 0
    %v1454 = vsel %vm59, %v1324, 0
    %v1457 = vsel %vm59, %v1328, 0
    %v1460 = vsel %vm59, %v1332, 0
    %v1463 = vsel %vm59, %v1336, 0
    %v1466 = vsel %vm59, %v1340, 0
    %v1469 = vsel %vm59, %v1344, 0
    %v1472 = vsel %vm59, %v1348, 0
    %v1475 = vsel %vm59, %v1352, 0
    %v1478 = vsel %vm59, %v1356, 0
    %v1481 = vsel %vm59, %v1360, 0
    %v1484 = vsel %vm59, %v1364, 0
    %v1487 = vsel %vm59, %v1368, 0
    %v1490 = vsel %vm59, %v1372, 0
    %v1492 = vand.u32 %v1490, 4294901760
    %1493 = vmatpush.xpose.msra.mxu0 %v1492
    %v1494 = vand.u32 %v1487, 4294901760
    %1495 = vmatpush.xpose.msra.mxu0 %v1494
    %v1496 = vand.u32 %v1484, 4294901760
    %1497 = vmatpush.xpose.msra.mxu0 %v1496
    %v1498 = vand.u32 %v1481, 4294901760
    %1499 = vmatpush.xpose.msra.mxu0 %v1498
    %v1500 = vand.u32 %v1478, 4294901760
    %1501 = vmatpush.xpose.msra.mxu0 %v1500
    %v1502 = vand.u32 %v1475, 4294901760
    %1503 = vmatpush.xpose.msra.mxu0 %v1502
    %v1504 = vand.u32 %v1472, 4294901760
    %1505 = vmatpush.xpose.msra.mxu0 %v1504
    %v1506 = vand.u32 %v1469, 4294901760
    %1507 = vmatpush.xpose.msra.mxu0 %v1506
    %v1508 = vand.u32 %v1466, 4294901760
    %1509 = vmatpush.xpose.msra.mxu0 %v1508
    %v1510 = vand.u32 %v1463, 4294901760
    %1511 = vmatpush.xpose.msra.mxu0 %v1510
    %v1512 = vand.u32 %v1460, 4294901760
    %1513 = vmatpush.xpose.msra.mxu0 %v1512
    %v1514 = vand.u32 %v1457, 4294901760
    %1515 = vmatpush.xpose.msra.mxu0 %v1514
    %v1516 = vand.u32 %v1454, 4294901760
    %1517 = vmatpush.xpose.msra.mxu0 %v1516
    %v1518 = vand.u32 %v1451, 4294901760
    %1519 = vmatpush.xpose.msra.mxu0 %v1518
    %v1520 = vand.u32 %v1448, 4294901760
    %1521 = vmatpush.xpose.msra.mxu0 %v1520
    %v1522 = vand.u32 %v1445, 4294901760
    %1523 = vmatpush.xpose.msra.mxu0 %v1522
    %v1524 = vand.u32 %v1439, 4294901760
    %v1525 = vsub.f32 %v1439, %v1524
    %v1526 = vand.u32 %v1525, 4294901760
    %v1527 = vsub.f32 %v1525, %v1526
    %v1528 = vand.u32 %v1527, 4294901760
    %1529 = vmatmul.f32.gmra.mxu0 %v1528
    %v1530 = vpop.f32.mrf.mxu0
    %v1531 = vadd.f32 0.0, %v1530
    %v1532 = vand.u32 %v1442, 4294901760
    %v1533 = vsub.f32 %v1442, %v1532
    %v1534 = vand.u32 %v1533, 4294901760
    %v1535 = vsub.f32 %v1533, %v1534
    %v1536 = vand.u32 %v1535, 4294901760
    %1537 = vmatmul.f32.gmra.mxu0 %v1536
    %v1538 = vpop.f32.mrf.mxu0
    %v1539 = vadd.f32 0.0, %v1538
    %1540 = vdwg.mxu0
    %v1541 = vand.u32 %v1490, 4294901760
    %v1542 = vsub.f32 %v1490, %v1541
    %v1543 = vand.u32 %v1542, 4294901760
    %v1544 = vsub.f32 %v1542, %v1543
    %v1545 = vand.u32 %v1544, 4294901760
    %1546 = vmatpush.xpose.msra.mxu0 %v1545
    %v1547 = vand.u32 %v1487, 4294901760
    %v1548 = vsub.f32 %v1487, %v1547
    %v1549 = vand.u32 %v1548, 4294901760
    %v1550 = vsub.f32 %v1548, %v1549
    %v1551 = vand.u32 %v1550, 4294901760
    %1552 = vmatpush.xpose.msra.mxu0 %v1551
    %v1553 = vand.u32 %v1484, 4294901760
    %v1554 = vsub.f32 %v1484, %v1553
    %v1555 = vand.u32 %v1554, 4294901760
    %v1556 = vsub.f32 %v1554, %v1555
    %v1557 = vand.u32 %v1556, 4294901760
    %1558 = vmatpush.xpose.msra.mxu0 %v1557
    %v1559 = vand.u32 %v1481, 4294901760
    %v1560 = vsub.f32 %v1481, %v1559
    %v1561 = vand.u32 %v1560, 4294901760
    %v1562 = vsub.f32 %v1560, %v1561
    %v1563 = vand.u32 %v1562, 4294901760
    %1564 = vmatpush.xpose.msra.mxu0 %v1563
    %v1565 = vand.u32 %v1478, 4294901760
    %v1566 = vsub.f32 %v1478, %v1565
    %v1567 = vand.u32 %v1566, 4294901760
    %v1568 = vsub.f32 %v1566, %v1567
    %v1569 = vand.u32 %v1568, 4294901760
    %1570 = vmatpush.xpose.msra.mxu0 %v1569
    %v1571 = vand.u32 %v1475, 4294901760
    %v1572 = vsub.f32 %v1475, %v1571
    %v1573 = vand.u32 %v1572, 4294901760
    %v1574 = vsub.f32 %v1572, %v1573
    %v1575 = vand.u32 %v1574, 4294901760
    %1576 = vmatpush.xpose.msra.mxu0 %v1575
    %v1577 = vand.u32 %v1472, 4294901760
    %v1578 = vsub.f32 %v1472, %v1577
    %v1579 = vand.u32 %v1578, 4294901760
    %v1580 = vsub.f32 %v1578, %v1579
    %v1581 = vand.u32 %v1580, 4294901760
    %1582 = vmatpush.xpose.msra.mxu0 %v1581
    %v1583 = vand.u32 %v1469, 4294901760
    %v1584 = vsub.f32 %v1469, %v1583
    %v1585 = vand.u32 %v1584, 4294901760
    %v1586 = vsub.f32 %v1584, %v1585
    %v1587 = vand.u32 %v1586, 4294901760
    %1588 = vmatpush.xpose.msra.mxu0 %v1587
    %v1589 = vand.u32 %v1466, 4294901760
    %v1590 = vsub.f32 %v1466, %v1589
    %v1591 = vand.u32 %v1590, 4294901760
    %v1592 = vsub.f32 %v1590, %v1591
    %v1593 = vand.u32 %v1592, 4294901760
    %1594 = vmatpush.xpose.msra.mxu0 %v1593
    %v1595 = vand.u32 %v1463, 4294901760
    %v1596 = vsub.f32 %v1463, %v1595
    %v1597 = vand.u32 %v1596, 4294901760
    %v1598 = vsub.f32 %v1596, %v1597
    %v1599 = vand.u32 %v1598, 4294901760
    %1600 = vmatpush.xpose.msra.mxu0 %v1599
    %v1601 = vand.u32 %v1460, 4294901760
    %v1602 = vsub.f32 %v1460, %v1601
    %v1603 = vand.u32 %v1602, 4294901760
    %v1604 = vsub.f32 %v1602, %v1603
    %v1605 = vand.u32 %v1604, 4294901760
    %1606 = vmatpush.xpose.msra.mxu0 %v1605
    %v1607 = vand.u32 %v1457, 4294901760
    %v1608 = vsub.f32 %v1457, %v1607
    %v1609 = vand.u32 %v1608, 4294901760
    %v1610 = vsub.f32 %v1608, %v1609
    %v1611 = vand.u32 %v1610, 4294901760
    %1612 = vmatpush.xpose.msra.mxu0 %v1611
    %v1613 = vand.u32 %v1454, 4294901760
    %v1614 = vsub.f32 %v1454, %v1613
    %v1615 = vand.u32 %v1614, 4294901760
    %v1616 = vsub.f32 %v1614, %v1615
    %v1617 = vand.u32 %v1616, 4294901760
    %1618 = vmatpush.xpose.msra.mxu0 %v1617
    %v1619 = vand.u32 %v1451, 4294901760
    %v1620 = vsub.f32 %v1451, %v1619
    %v1621 = vand.u32 %v1620, 4294901760
    %v1622 = vsub.f32 %v1620, %v1621
    %v1623 = vand.u32 %v1622, 4294901760
    %1624 = vmatpush.xpose.msra.mxu0 %v1623
    %v1625 = vand.u32 %v1448, 4294901760
    %v1626 = vsub.f32 %v1448, %v1625
    %v1627 = vand.u32 %v1626, 4294901760
    %v1628 = vsub.f32 %v1626, %v1627
    %v1629 = vand.u32 %v1628, 4294901760
    %1630 = vmatpush.xpose.msra.mxu0 %v1629
    %v1631 = vand.u32 %v1445, 4294901760
    %v1632 = vsub.f32 %v1445, %v1631
    %v1633 = vand.u32 %v1632, 4294901760
    %v1634 = vsub.f32 %v1632, %v1633
    %v1635 = vand.u32 %v1634, 4294901760
    %1636 = vmatpush.xpose.msra.mxu0 %v1635
    %v1637 = vand.u32 %v1439, 4294901760
    %1638 = vmatmul.f32.gmra.mxu0 %v1637
    %v1639 = vpop.f32.mrf.mxu0
    %v1640 = vadd.f32 %v1531, %v1639
    %v1641 = vand.u32 %v1442, 4294901760
    %1642 = vmatmul.f32.gmra.mxu0 %v1641
    %v1643 = vpop.f32.mrf.mxu0
    %v1644 = vadd.f32 %v1539, %v1643
    %1645 = vdwg.mxu0
    %v1646 = vand.u32 %v1490, 4294901760
    %v1647 = vsub.f32 %v1490, %v1646
    %1648 = vmatpush.xpose.msra.mxu0 %v1647
    %v1649 = vand.u32 %v1487, 4294901760
    %v1650 = vsub.f32 %v1487, %v1649
    %1651 = vmatpush.xpose.msra.mxu0 %v1650
    %v1652 = vand.u32 %v1484, 4294901760
    %v1653 = vsub.f32 %v1484, %v1652
    %1654 = vmatpush.xpose.msra.mxu0 %v1653
    %v1655 = vand.u32 %v1481, 4294901760
    %v1656 = vsub.f32 %v1481, %v1655
    %1657 = vmatpush.xpose.msra.mxu0 %v1656
    %v1658 = vand.u32 %v1478, 4294901760
    %v1659 = vsub.f32 %v1478, %v1658
    %1660 = vmatpush.xpose.msra.mxu0 %v1659
    %v1661 = vand.u32 %v1475, 4294901760
    %v1662 = vsub.f32 %v1475, %v1661
    %1663 = vmatpush.xpose.msra.mxu0 %v1662
    %v1664 = vand.u32 %v1472, 4294901760
    %v1665 = vsub.f32 %v1472, %v1664
    %1666 = vmatpush.xpose.msra.mxu0 %v1665
    %v1667 = vand.u32 %v1469, 4294901760
    %v1668 = vsub.f32 %v1469, %v1667
    %1669 = vmatpush.xpose.msra.mxu0 %v1668
    %v1670 = vand.u32 %v1466, 4294901760
    %v1671 = vsub.f32 %v1466, %v1670
    %1672 = vmatpush.xpose.msra.mxu0 %v1671
    %v1673 = vand.u32 %v1463, 4294901760
    %v1674 = vsub.f32 %v1463, %v1673
    %1675 = vmatpush.xpose.msra.mxu0 %v1674
    %v1676 = vand.u32 %v1460, 4294901760
    %v1677 = vsub.f32 %v1460, %v1676
    %1678 = vmatpush.xpose.msra.mxu0 %v1677
    %v1679 = vand.u32 %v1457, 4294901760
    %v1680 = vsub.f32 %v1457, %v1679
    %1681 = vmatpush.xpose.msra.mxu0 %v1680
    %v1682 = vand.u32 %v1454, 4294901760
    %v1683 = vsub.f32 %v1454, %v1682
    %1684 = vmatpush.xpose.msra.mxu0 %v1683
    %v1685 = vand.u32 %v1451, 4294901760
    %v1686 = vsub.f32 %v1451, %v1685
    %1687 = vmatpush.xpose.msra.mxu0 %v1686
    %v1688 = vand.u32 %v1448, 4294901760
    %v1689 = vsub.f32 %v1448, %v1688
    %1690 = vmatpush.xpose.msra.mxu0 %v1689
    %v1691 = vand.u32 %v1445, 4294901760
    %v1692 = vsub.f32 %v1445, %v1691
    %1693 = vmatpush.xpose.msra.mxu0 %v1692
    %v1694 = vand.u32 %v1439, 4294901760
    %v1695 = vsub.f32 %v1439, %v1694
    %1696 = vmatmul.f32.gmra.mxu0 %v1695
    %v1697 = vpop.f32.mrf.mxu0
    %v1698 = vadd.f32 %v1640, %v1697
    %v1699 = vand.u32 %v1442, 4294901760
    %v1700 = vsub.f32 %v1442, %v1699
    %1701 = vmatmul.f32.gmra.mxu0 %v1700
    %v1702 = vpop.f32.mrf.mxu0
    %v1703 = vadd.f32 %v1644, %v1702
    %1704 = vdwg.mxu0
    %v1705 = vand.u32 %v1490, 4294901760
    %1706 = vmatpush.xpose.msra.mxu0 %v1705
    %v1707 = vand.u32 %v1487, 4294901760
    %1708 = vmatpush.xpose.msra.mxu0 %v1707
    %v1709 = vand.u32 %v1484, 4294901760
    %1710 = vmatpush.xpose.msra.mxu0 %v1709
    %v1711 = vand.u32 %v1481, 4294901760
    %1712 = vmatpush.xpose.msra.mxu0 %v1711
    %v1713 = vand.u32 %v1478, 4294901760
    %1714 = vmatpush.xpose.msra.mxu0 %v1713
    %v1715 = vand.u32 %v1475, 4294901760
    %1716 = vmatpush.xpose.msra.mxu0 %v1715
    %v1717 = vand.u32 %v1472, 4294901760
    %1718 = vmatpush.xpose.msra.mxu0 %v1717
    %v1719 = vand.u32 %v1469, 4294901760
    %1720 = vmatpush.xpose.msra.mxu0 %v1719
    %v1721 = vand.u32 %v1466, 4294901760
    %1722 = vmatpush.xpose.msra.mxu0 %v1721
    %v1723 = vand.u32 %v1463, 4294901760
    %1724 = vmatpush.xpose.msra.mxu0 %v1723
    %v1725 = vand.u32 %v1460, 4294901760
    %1726 = vmatpush.xpose.msra.mxu0 %v1725
    %v1727 = vand.u32 %v1457, 4294901760
    %1728 = vmatpush.xpose.msra.mxu0 %v1727
    %v1729 = vand.u32 %v1454, 4294901760
    %1730 = vmatpush.xpose.msra.mxu0 %v1729
    %v1731 = vand.u32 %v1451, 4294901760
    %1732 = vmatpush.xpose.msra.mxu0 %v1731
    %v1733 = vand.u32 %v1448, 4294901760
    %1734 = vmatpush.xpose.msra.mxu0 %v1733
    %v1735 = vand.u32 %v1445, 4294901760
    %1736 = vmatpush.xpose.msra.mxu0 %v1735
    %v1737 = vand.u32 %v1439, 4294901760
    %v1738 = vsub.f32 %v1439, %v1737
    %v1739 = vand.u32 %v1738, 4294901760
    %1740 = vmatmul.f32.gmra.mxu0 %v1739
    %v1741 = vpop.f32.mrf.mxu0
    %v1742 = vadd.f32 %v1698, %v1741
    %v1743 = vand.u32 %v1442, 4294901760
    %v1744 = vsub.f32 %v1442, %v1743
    %v1745 = vand.u32 %v1744, 4294901760
    %1746 = vmatmul.f32.gmra.mxu0 %v1745
    %v1747 = vpop.f32.mrf.mxu0
    %v1748 = vadd.f32 %v1703, %v1747
    %1749 = vdwg.mxu0
    %v1750 = vand.u32 %v1490, 4294901760
    %v1751 = vsub.f32 %v1490, %v1750
    %v1752 = vand.u32 %v1751, 4294901760
    %1753 = vmatpush.xpose.msra.mxu0 %v1752
    %v1754 = vand.u32 %v1487, 4294901760
    %v1755 = vsub.f32 %v1487, %v1754
    %v1756 = vand.u32 %v1755, 4294901760
    %1757 = vmatpush.xpose.msra.mxu0 %v1756
    %v1758 = vand.u32 %v1484, 4294901760
    %v1759 = vsub.f32 %v1484, %v1758
    %v1760 = vand.u32 %v1759, 4294901760
    %1761 = vmatpush.xpose.msra.mxu0 %v1760
    %v1762 = vand.u32 %v1481, 4294901760
    %v1763 = vsub.f32 %v1481, %v1762
    %v1764 = vand.u32 %v1763, 4294901760
    %1765 = vmatpush.xpose.msra.mxu0 %v1764
    %v1766 = vand.u32 %v1478, 4294901760
    %v1767 = vsub.f32 %v1478, %v1766
    %v1768 = vand.u32 %v1767, 4294901760
    %1769 = vmatpush.xpose.msra.mxu0 %v1768
    %v1770 = vand.u32 %v1475, 4294901760
    %v1771 = vsub.f32 %v1475, %v1770
    %v1772 = vand.u32 %v1771, 4294901760
    %1773 = vmatpush.xpose.msra.mxu0 %v1772
    %v1774 = vand.u32 %v1472, 4294901760
    %v1775 = vsub.f32 %v1472, %v1774
    %v1776 = vand.u32 %v1775, 4294901760
    %1777 = vmatpush.xpose.msra.mxu0 %v1776
    %v1778 = vand.u32 %v1469, 4294901760
    %v1779 = vsub.f32 %v1469, %v1778
    %v1780 = vand.u32 %v1779, 4294901760
    %1781 = vmatpush.xpose.msra.mxu0 %v1780
    %v1782 = vand.u32 %v1466, 4294901760
    %v1783 = vsub.f32 %v1466, %v1782
    %v1784 = vand.u32 %v1783, 4294901760
    %1785 = vmatpush.xpose.msra.mxu0 %v1784
    %v1786 = vand.u32 %v1463, 4294901760
    %v1787 = vsub.f32 %v1463, %v1786
    %v1788 = vand.u32 %v1787, 4294901760
    %1789 = vmatpush.xpose.msra.mxu0 %v1788
    %v1790 = vand.u32 %v1460, 4294901760
    %v1791 = vsub.f32 %v1460, %v1790
    %v1792 = vand.u32 %v1791, 4294901760
    %1793 = vmatpush.xpose.msra.mxu0 %v1792
    %v1794 = vand.u32 %v1457, 4294901760
    %v1795 = vsub.f32 %v1457, %v1794
    %v1796 = vand.u32 %v1795, 4294901760
    %1797 = vmatpush.xpose.msra.mxu0 %v1796
    %v1798 = vand.u32 %v1454, 4294901760
    %v1799 = vsub.f32 %v1454, %v1798
    %v1800 = vand.u32 %v1799, 4294901760
    %1801 = vmatpush.xpose.msra.mxu0 %v1800
    %v1802 = vand.u32 %v1451, 4294901760
    %v1803 = vsub.f32 %v1451, %v1802
    %v1804 = vand.u32 %v1803, 4294901760
    %1805 = vmatpush.xpose.msra.mxu0 %v1804
    %v1806 = vand.u32 %v1448, 4294901760
    %v1807 = vsub.f32 %v1448, %v1806
    %v1808 = vand.u32 %v1807, 4294901760
    %1809 = vmatpush.xpose.msra.mxu0 %v1808
    %v1810 = vand.u32 %v1445, 4294901760
    %v1811 = vsub.f32 %v1445, %v1810
    %v1812 = vand.u32 %v1811, 4294901760
    %1813 = vmatpush.xpose.msra.mxu0 %v1812
    %v1814 = vand.u32 %v1439, 4294901760
    %1815 = vmatmul.f32.gmra.mxu0 %v1814
    %v1816 = vpop.f32.mrf.mxu0
    %v1817 = vadd.f32 %v1742, %v1816
    %v1818 = vand.u32 %v1442, 4294901760
    %1819 = vmatmul.f32.gmra.mxu0 %v1818
    %v1820 = vpop.f32.mrf.mxu0
    %v1821 = vadd.f32 %v1748, %v1820
    %1822 = vdwg.mxu0
    %v1823 = vand.u32 %v1490, 4294901760
    %1824 = vmatpush.xpose.msra.mxu0 %v1823
    %v1825 = vand.u32 %v1487, 4294901760
    %1826 = vmatpush.xpose.msra.mxu0 %v1825
    %v1827 = vand.u32 %v1484, 4294901760
    %1828 = vmatpush.xpose.msra.mxu0 %v1827
    %v1829 = vand.u32 %v1481, 4294901760
    %1830 = vmatpush.xpose.msra.mxu0 %v1829
    %v1831 = vand.u32 %v1478, 4294901760
    %1832 = vmatpush.xpose.msra.mxu0 %v1831
    %v1833 = vand.u32 %v1475, 4294901760
    %1834 = vmatpush.xpose.msra.mxu0 %v1833
    %v1835 = vand.u32 %v1472, 4294901760
    %1836 = vmatpush.xpose.msra.mxu0 %v1835
    %v1837 = vand.u32 %v1469, 4294901760
    %1838 = vmatpush.xpose.msra.mxu0 %v1837
    %v1839 = vand.u32 %v1466, 4294901760
    %1840 = vmatpush.xpose.msra.mxu0 %v1839
    %v1841 = vand.u32 %v1463, 4294901760
    %1842 = vmatpush.xpose.msra.mxu0 %v1841
    %v1843 = vand.u32 %v1460, 4294901760
    %1844 = vmatpush.xpose.msra.mxu0 %v1843
    %v1845 = vand.u32 %v1457, 4294901760
    %1846 = vmatpush.xpose.msra.mxu0 %v1845
    %v1847 = vand.u32 %v1454, 4294901760
    %1848 = vmatpush.xpose.msra.mxu0 %v1847
    %v1849 = vand.u32 %v1451, 4294901760
    %1850 = vmatpush.xpose.msra.mxu0 %v1849
    %v1851 = vand.u32 %v1448, 4294901760
    %1852 = vmatpush.xpose.msra.mxu0 %v1851
    %v1853 = vand.u32 %v1445, 4294901760
    %1854 = vmatpush.xpose.msra.mxu0 %v1853
    %v1855 = vand.u32 %v1439, 4294901760
    %1856 = vmatmul.f32.gmra.mxu0 %v1855
    %v1857 = vpop.f32.mrf.mxu0
    %v1858 = vadd.f32 %v1817, %v1857
    %v1859 = vand.u32 %v1442, 4294901760
    %1860 = vmatmul.f32.gmra.mxu0 %v1859
    %v1861 = vpop.f32.mrf.mxu0
    %v1862 = vadd.f32 %v1821, %v1861
    %1863 = vdwg.mxu0
    %v1865 = vsel %vm59, %v1304, 0
    %v1868 = vsel %vm59, %v1308, 0
    %v1871 = vsel %vm59, %v1376, 0
    %v1874 = vsel %vm59, %v1380, 0
    %v1877 = vsel %vm59, %v1384, 0
    %v1880 = vsel %vm59, %v1388, 0
    %v1883 = vsel %vm59, %v1392, 0
    %v1886 = vsel %vm59, %v1396, 0
    %v1889 = vsel %vm59, %v1400, 0
    %v1892 = vsel %vm59, %v1404, 0
    %v1895 = vsel %vm59, %v1408, 0
    %v1898 = vsel %vm59, %v1412, 0
    %v1901 = vsel %vm59, %v1416, 0
    %v1904 = vsel %vm59, %v1420, 0
    %v1907 = vsel %vm59, %v1424, 0
    %v1910 = vsel %vm59, %v1428, 0
    %v1913 = vsel %vm59, %v1432, 0
    %v1916 = vsel %vm59, %v1436, 0
    %v1918 = vand.u32 %v1916, 4294901760
    %1919 = vmatpush.xpose.msra.mxu0 %v1918
    %v1920 = vand.u32 %v1913, 4294901760
    %1921 = vmatpush.xpose.msra.mxu0 %v1920
    %v1922 = vand.u32 %v1910, 4294901760
    %1923 = vmatpush.xpose.msra.mxu0 %v1922
    %v1924 = vand.u32 %v1907, 4294901760
    %1925 = vmatpush.xpose.msra.mxu0 %v1924
    %v1926 = vand.u32 %v1904, 4294901760
    %1927 = vmatpush.xpose.msra.mxu0 %v1926
    %v1928 = vand.u32 %v1901, 4294901760
    %1929 = vmatpush.xpose.msra.mxu0 %v1928
    %v1930 = vand.u32 %v1898, 4294901760
    %1931 = vmatpush.xpose.msra.mxu0 %v1930
    %v1932 = vand.u32 %v1895, 4294901760
    %1933 = vmatpush.xpose.msra.mxu0 %v1932
    %v1934 = vand.u32 %v1892, 4294901760
    %1935 = vmatpush.xpose.msra.mxu0 %v1934
    %v1936 = vand.u32 %v1889, 4294901760
    %1937 = vmatpush.xpose.msra.mxu0 %v1936
    %v1938 = vand.u32 %v1886, 4294901760
    %1939 = vmatpush.xpose.msra.mxu0 %v1938
    %v1940 = vand.u32 %v1883, 4294901760
    %1941 = vmatpush.xpose.msra.mxu0 %v1940
    %v1942 = vand.u32 %v1880, 4294901760
    %1943 = vmatpush.xpose.msra.mxu0 %v1942
    %v1944 = vand.u32 %v1877, 4294901760
    %1945 = vmatpush.xpose.msra.mxu0 %v1944
    %v1946 = vand.u32 %v1874, 4294901760
    %1947 = vmatpush.xpose.msra.mxu0 %v1946
    %v1948 = vand.u32 %v1871, 4294901760
    %1949 = vmatpush.xpose.msra.mxu0 %v1948
    %v1950 = vand.u32 %v1865, 4294901760
    %v1951 = vsub.f32 %v1865, %v1950
    %v1952 = vand.u32 %v1951, 4294901760
    %v1953 = vsub.f32 %v1951, %v1952
    %v1954 = vand.u32 %v1953, 4294901760
    %1955 = vmatmul.f32.gmra.mxu0 %v1954
    %v1956 = vpop.f32.mrf.mxu0
    %v1957 = vadd.f32 0.0, %v1956
    %v1958 = vand.u32 %v1868, 4294901760
    %v1959 = vsub.f32 %v1868, %v1958
    %v1960 = vand.u32 %v1959, 4294901760
    %v1961 = vsub.f32 %v1959, %v1960
    %v1962 = vand.u32 %v1961, 4294901760
    %1963 = vmatmul.f32.gmra.mxu0 %v1962
    %v1964 = vpop.f32.mrf.mxu0
    %v1965 = vadd.f32 0.0, %v1964
    %1966 = vdwg.mxu0
    %v1967 = vand.u32 %v1916, 4294901760
    %v1968 = vsub.f32 %v1916, %v1967
    %v1969 = vand.u32 %v1968, 4294901760
    %v1970 = vsub.f32 %v1968, %v1969
    %v1971 = vand.u32 %v1970, 4294901760
    %1972 = vmatpush.xpose.msra.mxu0 %v1971
    %v1973 = vand.u32 %v1913, 4294901760
    %v1974 = vsub.f32 %v1913, %v1973
    %v1975 = vand.u32 %v1974, 4294901760
    %v1976 = vsub.f32 %v1974, %v1975
    %v1977 = vand.u32 %v1976, 4294901760
    %1978 = vmatpush.xpose.msra.mxu0 %v1977
    %v1979 = vand.u32 %v1910, 4294901760
    %v1980 = vsub.f32 %v1910, %v1979
    %v1981 = vand.u32 %v1980, 4294901760
    %v1982 = vsub.f32 %v1980, %v1981
    %v1983 = vand.u32 %v1982, 4294901760
    %1984 = vmatpush.xpose.msra.mxu0 %v1983
    %v1985 = vand.u32 %v1907, 4294901760
    %v1986 = vsub.f32 %v1907, %v1985
    %v1987 = vand.u32 %v1986, 4294901760
    %v1988 = vsub.f32 %v1986, %v1987
    %v1989 = vand.u32 %v1988, 4294901760
    %1990 = vmatpush.xpose.msra.mxu0 %v1989
    %v1991 = vand.u32 %v1904, 4294901760
    %v1992 = vsub.f32 %v1904, %v1991
    %v1993 = vand.u32 %v1992, 4294901760
    %v1994 = vsub.f32 %v1992, %v1993
    %v1995 = vand.u32 %v1994, 4294901760
    %1996 = vmatpush.xpose.msra.mxu0 %v1995
    %v1997 = vand.u32 %v1901, 4294901760
    %v1998 = vsub.f32 %v1901, %v1997
    %v1999 = vand.u32 %v1998, 4294901760
    %v2000 = vsub.f32 %v1998, %v1999
    %v2001 = vand.u32 %v2000, 4294901760
    %2002 = vmatpush.xpose.msra.mxu0 %v2001
    %v2003 = vand.u32 %v1898, 4294901760
    %v2004 = vsub.f32 %v1898, %v2003
    %v2005 = vand.u32 %v2004, 4294901760
    %v2006 = vsub.f32 %v2004, %v2005
    %v2007 = vand.u32 %v2006, 4294901760
    %2008 = vmatpush.xpose.msra.mxu0 %v2007
    %v2009 = vand.u32 %v1895, 4294901760
    %v2010 = vsub.f32 %v1895, %v2009
    %v2011 = vand.u32 %v2010, 4294901760
    %v2012 = vsub.f32 %v2010, %v2011
    %v2013 = vand.u32 %v2012, 4294901760
    %2014 = vmatpush.xpose.msra.mxu0 %v2013
    %v2015 = vand.u32 %v1892, 4294901760
    %v2016 = vsub.f32 %v1892, %v2015
    %v2017 = vand.u32 %v2016, 4294901760
    %v2018 = vsub.f32 %v2016, %v2017
    %v2019 = vand.u32 %v2018, 4294901760
    %2020 = vmatpush.xpose.msra.mxu0 %v2019
    %v2021 = vand.u32 %v1889, 4294901760
    %v2022 = vsub.f32 %v1889, %v2021
    %v2023 = vand.u32 %v2022, 4294901760
    %v2024 = vsub.f32 %v2022, %v2023
    %v2025 = vand.u32 %v2024, 4294901760
    %2026 = vmatpush.xpose.msra.mxu0 %v2025
    %v2027 = vand.u32 %v1886, 4294901760
    %v2028 = vsub.f32 %v1886, %v2027
    %v2029 = vand.u32 %v2028, 4294901760
    %v2030 = vsub.f32 %v2028, %v2029
    %v2031 = vand.u32 %v2030, 4294901760
    %2032 = vmatpush.xpose.msra.mxu0 %v2031
    %v2033 = vand.u32 %v1883, 4294901760
    %v2034 = vsub.f32 %v1883, %v2033
    %v2035 = vand.u32 %v2034, 4294901760
    %v2036 = vsub.f32 %v2034, %v2035
    %v2037 = vand.u32 %v2036, 4294901760
    %2038 = vmatpush.xpose.msra.mxu0 %v2037
    %v2039 = vand.u32 %v1880, 4294901760
    %v2040 = vsub.f32 %v1880, %v2039
    %v2041 = vand.u32 %v2040, 4294901760
    %v2042 = vsub.f32 %v2040, %v2041
    %v2043 = vand.u32 %v2042, 4294901760
    %2044 = vmatpush.xpose.msra.mxu0 %v2043
    %v2045 = vand.u32 %v1877, 4294901760
    %v2046 = vsub.f32 %v1877, %v2045
    %v2047 = vand.u32 %v2046, 4294901760
    %v2048 = vsub.f32 %v2046, %v2047
    %v2049 = vand.u32 %v2048, 4294901760
    %2050 = vmatpush.xpose.msra.mxu0 %v2049
    %v2051 = vand.u32 %v1874, 4294901760
    %v2052 = vsub.f32 %v1874, %v2051
    %v2053 = vand.u32 %v2052, 4294901760
    %v2054 = vsub.f32 %v2052, %v2053
    %v2055 = vand.u32 %v2054, 4294901760
    %2056 = vmatpush.xpose.msra.mxu0 %v2055
    %v2057 = vand.u32 %v1871, 4294901760
    %v2058 = vsub.f32 %v1871, %v2057
    %v2059 = vand.u32 %v2058, 4294901760
    %v2060 = vsub.f32 %v2058, %v2059
    %v2061 = vand.u32 %v2060, 4294901760
    %2062 = vmatpush.xpose.msra.mxu0 %v2061
    %v2063 = vand.u32 %v1865, 4294901760
    %2064 = vmatmul.f32.gmra.mxu0 %v2063
    %v2065 = vpop.f32.mrf.mxu0
    %v2066 = vadd.f32 %v1957, %v2065
    %v2067 = vand.u32 %v1868, 4294901760
    %2068 = vmatmul.f32.gmra.mxu0 %v2067
    %v2069 = vpop.f32.mrf.mxu0
    %v2070 = vadd.f32 %v1965, %v2069
    %2071 = vdwg.mxu0
    %v2072 = vand.u32 %v1916, 4294901760
    %v2073 = vsub.f32 %v1916, %v2072
    %2074 = vmatpush.xpose.msra.mxu0 %v2073
    %v2075 = vand.u32 %v1913, 4294901760
    %v2076 = vsub.f32 %v1913, %v2075
    %2077 = vmatpush.xpose.msra.mxu0 %v2076
    %v2078 = vand.u32 %v1910, 4294901760
    %v2079 = vsub.f32 %v1910, %v2078
    %2080 = vmatpush.xpose.msra.mxu0 %v2079
    %v2081 = vand.u32 %v1907, 4294901760
    %v2082 = vsub.f32 %v1907, %v2081
    %2083 = vmatpush.xpose.msra.mxu0 %v2082
    %v2084 = vand.u32 %v1904, 4294901760
    %v2085 = vsub.f32 %v1904, %v2084
    %2086 = vmatpush.xpose.msra.mxu0 %v2085
    %v2087 = vand.u32 %v1901, 4294901760
    %v2088 = vsub.f32 %v1901, %v2087
    %2089 = vmatpush.xpose.msra.mxu0 %v2088
    %v2090 = vand.u32 %v1898, 4294901760
    %v2091 = vsub.f32 %v1898, %v2090
    %2092 = vmatpush.xpose.msra.mxu0 %v2091
    %v2093 = vand.u32 %v1895, 4294901760
    %v2094 = vsub.f32 %v1895, %v2093
    %2095 = vmatpush.xpose.msra.mxu0 %v2094
    %v2096 = vand.u32 %v1892, 4294901760
    %v2097 = vsub.f32 %v1892, %v2096
    %2098 = vmatpush.xpose.msra.mxu0 %v2097
    %v2099 = vand.u32 %v1889, 4294901760
    %v2100 = vsub.f32 %v1889, %v2099
    %2101 = vmatpush.xpose.msra.mxu0 %v2100
    %v2102 = vand.u32 %v1886, 4294901760
    %v2103 = vsub.f32 %v1886, %v2102
    %2104 = vmatpush.xpose.msra.mxu0 %v2103
    %v2105 = vand.u32 %v1883, 4294901760
    %v2106 = vsub.f32 %v1883, %v2105
    %2107 = vmatpush.xpose.msra.mxu0 %v2106
    %v2108 = vand.u32 %v1880, 4294901760
    %v2109 = vsub.f32 %v1880, %v2108
    %2110 = vmatpush.xpose.msra.mxu0 %v2109
    %v2111 = vand.u32 %v1877, 4294901760
    %v2112 = vsub.f32 %v1877, %v2111
    %2113 = vmatpush.xpose.msra.mxu0 %v2112
    %v2114 = vand.u32 %v1874, 4294901760
    %v2115 = vsub.f32 %v1874, %v2114
    %2116 = vmatpush.xpose.msra.mxu0 %v2115
    %v2117 = vand.u32 %v1871, 4294901760
    %v2118 = vsub.f32 %v1871, %v2117
    %2119 = vmatpush.xpose.msra.mxu0 %v2118
    %v2120 = vand.u32 %v1865, 4294901760
    %v2121 = vsub.f32 %v1865, %v2120
    %2122 = vmatmul.f32.gmra.mxu0 %v2121
    %v2123 = vpop.f32.mrf.mxu0
    %v2124 = vadd.f32 %v2066, %v2123
    %v2125 = vand.u32 %v1868, 4294901760
    %v2126 = vsub.f32 %v1868, %v2125
    %2127 = vmatmul.f32.gmra.mxu0 %v2126
    %v2128 = vpop.f32.mrf.mxu0
    %v2129 = vadd.f32 %v2070, %v2128
    %2130 = vdwg.mxu0
    %v2131 = vand.u32 %v1916, 4294901760
    %2132 = vmatpush.xpose.msra.mxu0 %v2131
    %v2133 = vand.u32 %v1913, 4294901760
    %2134 = vmatpush.xpose.msra.mxu0 %v2133
    %v2135 = vand.u32 %v1910, 4294901760
    %2136 = vmatpush.xpose.msra.mxu0 %v2135
    %v2137 = vand.u32 %v1907, 4294901760
    %2138 = vmatpush.xpose.msra.mxu0 %v2137
    %v2139 = vand.u32 %v1904, 4294901760
    %2140 = vmatpush.xpose.msra.mxu0 %v2139
    %v2141 = vand.u32 %v1901, 4294901760
    %2142 = vmatpush.xpose.msra.mxu0 %v2141
    %v2143 = vand.u32 %v1898, 4294901760
    %2144 = vmatpush.xpose.msra.mxu0 %v2143
    %v2145 = vand.u32 %v1895, 4294901760
    %2146 = vmatpush.xpose.msra.mxu0 %v2145
    %v2147 = vand.u32 %v1892, 4294901760
    %2148 = vmatpush.xpose.msra.mxu0 %v2147
    %v2149 = vand.u32 %v1889, 4294901760
    %2150 = vmatpush.xpose.msra.mxu0 %v2149
    %v2151 = vand.u32 %v1886, 4294901760
    %2152 = vmatpush.xpose.msra.mxu0 %v2151
    %v2153 = vand.u32 %v1883, 4294901760
    %2154 = vmatpush.xpose.msra.mxu0 %v2153
    %v2155 = vand.u32 %v1880, 4294901760
    %2156 = vmatpush.xpose.msra.mxu0 %v2155
    %v2157 = vand.u32 %v1877, 4294901760
    %2158 = vmatpush.xpose.msra.mxu0 %v2157
    %v2159 = vand.u32 %v1874, 4294901760
    %2160 = vmatpush.xpose.msra.mxu0 %v2159
    %v2161 = vand.u32 %v1871, 4294901760
    %2162 = vmatpush.xpose.msra.mxu0 %v2161
    %v2163 = vand.u32 %v1865, 4294901760
    %v2164 = vsub.f32 %v1865, %v2163
    %v2165 = vand.u32 %v2164, 4294901760
    %2166 = vmatmul.f32.gmra.mxu0 %v2165
    %v2167 = vpop.f32.mrf.mxu0
    %v2168 = vadd.f32 %v2124, %v2167
    %v2169 = vand.u32 %v1868, 4294901760
    %v2170 = vsub.f32 %v1868, %v2169
    %v2171 = vand.u32 %v2170, 4294901760
    %2172 = vmatmul.f32.gmra.mxu0 %v2171
    %v2173 = vpop.f32.mrf.mxu0
    %v2174 = vadd.f32 %v2129, %v2173
    %2175 = vdwg.mxu0
    %v2176 = vand.u32 %v1916, 4294901760
    %v2177 = vsub.f32 %v1916, %v2176
    %v2178 = vand.u32 %v2177, 4294901760
    %2179 = vmatpush.xpose.msra.mxu0 %v2178
    %v2180 = vand.u32 %v1913, 4294901760
    %v2181 = vsub.f32 %v1913, %v2180
    %v2182 = vand.u32 %v2181, 4294901760
    %2183 = vmatpush.xpose.msra.mxu0 %v2182
    %v2184 = vand.u32 %v1910, 4294901760
    %v2185 = vsub.f32 %v1910, %v2184
    %v2186 = vand.u32 %v2185, 4294901760
    %2187 = vmatpush.xpose.msra.mxu0 %v2186
    %v2188 = vand.u32 %v1907, 4294901760
    %v2189 = vsub.f32 %v1907, %v2188
    %v2190 = vand.u32 %v2189, 4294901760
    %2191 = vmatpush.xpose.msra.mxu0 %v2190
    %v2192 = vand.u32 %v1904, 4294901760
    %v2193 = vsub.f32 %v1904, %v2192
    %v2194 = vand.u32 %v2193, 4294901760
    %2195 = vmatpush.xpose.msra.mxu0 %v2194
    %v2196 = vand.u32 %v1901, 4294901760
    %v2197 = vsub.f32 %v1901, %v2196
    %v2198 = vand.u32 %v2197, 4294901760
    %2199 = vmatpush.xpose.msra.mxu0 %v2198
    %v2200 = vand.u32 %v1898, 4294901760
    %v2201 = vsub.f32 %v1898, %v2200
    %v2202 = vand.u32 %v2201, 4294901760
    %2203 = vmatpush.xpose.msra.mxu0 %v2202
    %v2204 = vand.u32 %v1895, 4294901760
    %v2205 = vsub.f32 %v1895, %v2204
    %v2206 = vand.u32 %v2205, 4294901760
    %2207 = vmatpush.xpose.msra.mxu0 %v2206
    %v2208 = vand.u32 %v1892, 4294901760
    %v2209 = vsub.f32 %v1892, %v2208
    %v2210 = vand.u32 %v2209, 4294901760
    %2211 = vmatpush.xpose.msra.mxu0 %v2210
    %v2212 = vand.u32 %v1889, 4294901760
    %v2213 = vsub.f32 %v1889, %v2212
    %v2214 = vand.u32 %v2213, 4294901760
    %2215 = vmatpush.xpose.msra.mxu0 %v2214
    %v2216 = vand.u32 %v1886, 4294901760
    %v2217 = vsub.f32 %v1886, %v2216
    %v2218 = vand.u32 %v2217, 4294901760
    %2219 = vmatpush.xpose.msra.mxu0 %v2218
    %v2220 = vand.u32 %v1883, 4294901760
    %v2221 = vsub.f32 %v1883, %v2220
    %v2222 = vand.u32 %v2221, 4294901760
    %2223 = vmatpush.xpose.msra.mxu0 %v2222
    %v2224 = vand.u32 %v1880, 4294901760
    %v2225 = vsub.f32 %v1880, %v2224
    %v2226 = vand.u32 %v2225, 4294901760
    %2227 = vmatpush.xpose.msra.mxu0 %v2226
    %v2228 = vand.u32 %v1877, 4294901760
    %v2229 = vsub.f32 %v1877, %v2228
    %v2230 = vand.u32 %v2229, 4294901760
    %2231 = vmatpush.xpose.msra.mxu0 %v2230
    %v2232 = vand.u32 %v1874, 4294901760
    %v2233 = vsub.f32 %v1874, %v2232
    %v2234 = vand.u32 %v2233, 4294901760
    %2235 = vmatpush.xpose.msra.mxu0 %v2234
    %v2236 = vand.u32 %v1871, 4294901760
    %v2237 = vsub.f32 %v1871, %v2236
    %v2238 = vand.u32 %v2237, 4294901760
    %2239 = vmatpush.xpose.msra.mxu0 %v2238
    %v2240 = vand.u32 %v1865, 4294901760
    %2241 = vmatmul.f32.gmra.mxu0 %v2240
    %v2242 = vpop.f32.mrf.mxu0
    %v2243 = vadd.f32 %v2168, %v2242
    %v2244 = vand.u32 %v1868, 4294901760
    %2245 = vmatmul.f32.gmra.mxu0 %v2244
    %v2246 = vpop.f32.mrf.mxu0
    %v2247 = vadd.f32 %v2174, %v2246
    %2248 = vdwg.mxu0
    %v2249 = vand.u32 %v1916, 4294901760
    %2250 = vmatpush.xpose.msra.mxu0 %v2249
    %v2251 = vand.u32 %v1913, 4294901760
    %2252 = vmatpush.xpose.msra.mxu0 %v2251
    %v2253 = vand.u32 %v1910, 4294901760
    %2254 = vmatpush.xpose.msra.mxu0 %v2253
    %v2255 = vand.u32 %v1907, 4294901760
    %2256 = vmatpush.xpose.msra.mxu0 %v2255
    %v2257 = vand.u32 %v1904, 4294901760
    %2258 = vmatpush.xpose.msra.mxu0 %v2257
    %v2259 = vand.u32 %v1901, 4294901760
    %2260 = vmatpush.xpose.msra.mxu0 %v2259
    %v2261 = vand.u32 %v1898, 4294901760
    %2262 = vmatpush.xpose.msra.mxu0 %v2261
    %v2263 = vand.u32 %v1895, 4294901760
    %2264 = vmatpush.xpose.msra.mxu0 %v2263
    %v2265 = vand.u32 %v1892, 4294901760
    %2266 = vmatpush.xpose.msra.mxu0 %v2265
    %v2267 = vand.u32 %v1889, 4294901760
    %2268 = vmatpush.xpose.msra.mxu0 %v2267
    %v2269 = vand.u32 %v1886, 4294901760
    %2270 = vmatpush.xpose.msra.mxu0 %v2269
    %v2271 = vand.u32 %v1883, 4294901760
    %2272 = vmatpush.xpose.msra.mxu0 %v2271
    %v2273 = vand.u32 %v1880, 4294901760
    %2274 = vmatpush.xpose.msra.mxu0 %v2273
    %v2275 = vand.u32 %v1877, 4294901760
    %2276 = vmatpush.xpose.msra.mxu0 %v2275
    %v2277 = vand.u32 %v1874, 4294901760
    %2278 = vmatpush.xpose.msra.mxu0 %v2277
    %v2279 = vand.u32 %v1871, 4294901760
    %2280 = vmatpush.xpose.msra.mxu0 %v2279
    %v2281 = vand.u32 %v1865, 4294901760
    %2282 = vmatmul.f32.gmra.mxu0 %v2281
    %v2283 = vpop.f32.mrf.mxu0
    %v2284 = vadd.f32 %v2243, %v2283
    %v2285 = vand.u32 %v1868, 4294901760
    %2286 = vmatmul.f32.gmra.mxu0 %v2285
    %v2287 = vpop.f32.mrf.mxu0
    %v2288 = vadd.f32 %v2247, %v2287
    %2289 = vdwg.mxu0
    %v2290 = vlaneseq
    %v2291 = vand.u32 %v2290, 127
    %2292 = vmax.xlane.f32.xlu0 %v1858
    %v2293 = vpop.xlane.xlu0 %2292
    %2294 = vmax.xlane.f32.xlu0 %v1862
    %v2295 = vpop.xlane.xlu0 %2294
    %2296 = vmax.xlane.f32.xlu0 %v2284
    %v2297 = vpop.xlane.xlu0 %2296
    %2298 = vmax.xlane.f32.xlu0 %v2288
    %v2299 = vpop.xlane.xlu0 %2298
    %vm2300 = vcmp.ge.f32.partialorder %v1858, %v2293
    %vm2301 = vcmp.ge.f32.partialorder %v1862, %v2295
    %vm2302 = vcmp.ge.f32.partialorder %v2284, %v2297
    %vm2303 = vcmp.ge.f32.partialorder %v2288, %v2299
    %v2304 = vsel %vm2300, %v2291, 128
    %v2305 = vsel %vm2301, %v2291, 128
    %v2306 = vsel %vm2302, %v2291, 128
    %v2307 = vsel %vm2303, %v2291, 128
    %v2308 = vand.u32 %v2304, 65535
    %v2309 = vshra.s32 %v2304, 16
    %v2310 = vcvt.s32.f32 %v2308
    %v2311 = vcvt.s32.f32 %v2309
    %2312 = vmin.xlane.f32.xlu0 %v2311
    %v2313 = vpop.xlane.xlu0 %2312
    %vm2314 = vcmp.eq.f32.partialorder %v2311, %v2313
    %v2315 = vsel %vm2314, %v2310, inf
    %2316 = vmin.xlane.f32.xlu0 %v2315
    %v2317 = vpop.xlane.xlu0 %2316
    %v2318 = vcvt.f32.s32 %v2317
    %v2319 = vcvt.f32.s32 %v2313
    %v2320 = vshll.u32 %v2319, 16
    %v2321 = vadd.s32 %v2320, %v2318
    %v2322 = vand.u32 %v2305, 65535
    %v2323 = vshra.s32 %v2305, 16
    %v2324 = vcvt.s32.f32 %v2322
    %v2325 = vcvt.s32.f32 %v2323
    %2326 = vmin.xlane.f32.xlu0 %v2325
    %v2327 = vpop.xlane.xlu0 %2326
    %vm2328 = vcmp.eq.f32.partialorder %v2325, %v2327
    %v2329 = vsel %vm2328, %v2324, inf
    %2330 = vmin.xlane.f32.xlu0 %v2329
    %v2331 = vpop.xlane.xlu0 %2330
    %v2332 = vcvt.f32.s32 %v2331
    %v2333 = vcvt.f32.s32 %v2327
    %v2334 = vshll.u32 %v2333, 16
    %v2335 = vadd.s32 %v2334, %v2332
    %v2336 = vand.u32 %v2306, 65535
    %v2337 = vshra.s32 %v2306, 16
    %v2338 = vcvt.s32.f32 %v2336
    %v2339 = vcvt.s32.f32 %v2337
    %2340 = vmin.xlane.f32.xlu0 %v2339
    %v2341 = vpop.xlane.xlu0 %2340
    %vm2342 = vcmp.eq.f32.partialorder %v2339, %v2341
    %v2343 = vsel %vm2342, %v2338, inf
    %2344 = vmin.xlane.f32.xlu0 %v2343
    %v2345 = vpop.xlane.xlu0 %2344
    %v2346 = vcvt.f32.s32 %v2345
    %v2347 = vcvt.f32.s32 %v2341
    %v2348 = vshll.u32 %v2347, 16
    %v2349 = vadd.s32 %v2348, %v2346
    %v2350 = vand.u32 %v2307, 65535
    %v2351 = vshra.s32 %v2307, 16
    %v2352 = vcvt.s32.f32 %v2350
    %v2353 = vcvt.s32.f32 %v2351
    %2354 = vmin.xlane.f32.xlu0 %v2353
    %v2355 = vpop.xlane.xlu0 %2354
    %vm2356 = vcmp.eq.f32.partialorder %v2353, %v2355
    %v2357 = vsel %vm2356, %v2352, inf
    %2358 = vmin.xlane.f32.xlu0 %v2357
    %v2359 = vpop.xlane.xlu0 %2358
    %v2360 = vcvt.f32.s32 %v2359
    %v2361 = vcvt.f32.s32 %v2355
    %v2362 = vshll.u32 %v2361, 16
    %v2363 = vadd.s32 %v2362, %v2360
    %vm2364 = vcmp.eq.s32.totalorder %v2291, %v2321
    %vm2365 = vcmp.eq.s32.totalorder %v2291, %v2335
    %vm2366 = vcmp.eq.s32.totalorder %v2291, %v2349
    %vm2367 = vcmp.eq.s32.totalorder %v2291, %v2363
    %v2368 = vsel %vm2364, -1e+30, %v1858
    %v2369 = vsel %vm2365, -1e+30, %v1862
    %v2370 = vsel %vm2366, -1e+30, %v2284
    %v2371 = vsel %vm2367, -1e+30, %v2288
    %2372 = vmax.xlane.f32.xlu0 %v2368
    %v2373 = vpop.xlane.xlu0 %2372
    %2374 = vmax.xlane.f32.xlu0 %v2369
    %v2375 = vpop.xlane.xlu0 %2374
    %2376 = vmax.xlane.f32.xlu0 %v2370
    %v2377 = vpop.xlane.xlu0 %2376
    %2378 = vmax.xlane.f32.xlu0 %v2371
    %v2379 = vpop.xlane.xlu0 %2378
    %vm2380 = vcmp.ge.f32.partialorder %v2368, %v2373
    %vm2381 = vcmp.ge.f32.partialorder %v2369, %v2375
    %vm2382 = vcmp.ge.f32.partialorder %v2370, %v2377
    %vm2383 = vcmp.ge.f32.partialorder %v2371, %v2379
    %v2384 = vsel %vm2380, %v2291, 128
    %v2385 = vsel %vm2381, %v2291, 128
    %v2386 = vsel %vm2382, %v2291, 128
    %v2387 = vsel %vm2383, %v2291, 128
    %v2388 = vand.u32 %v2384, 65535
    %v2389 = vshra.s32 %v2384, 16
    %v2390 = vcvt.s32.f32 %v2388
    %v2391 = vcvt.s32.f32 %v2389
    %2392 = vmin.xlane.f32.xlu0 %v2391
    %v2393 = vpop.xlane.xlu0 %2392
    %vm2394 = vcmp.eq.f32.partialorder %v2391, %v2393
    %v2395 = vsel %vm2394, %v2390, inf
    %2396 = vmin.xlane.f32.xlu0 %v2395
    %v2397 = vpop.xlane.xlu0 %2396
    %v2398 = vcvt.f32.s32 %v2397
    %v2399 = vcvt.f32.s32 %v2393
    %v2400 = vshll.u32 %v2399, 16
    %v2401 = vadd.s32 %v2400, %v2398
    %v2402 = vand.u32 %v2385, 65535
    %v2403 = vshra.s32 %v2385, 16
    %v2404 = vcvt.s32.f32 %v2402
    %v2405 = vcvt.s32.f32 %v2403
    %2406 = vmin.xlane.f32.xlu0 %v2405
    %v2407 = vpop.xlane.xlu0 %2406
    %vm2408 = vcmp.eq.f32.partialorder %v2405, %v2407
    %v2409 = vsel %vm2408, %v2404, inf
    %2410 = vmin.xlane.f32.xlu0 %v2409
    %v2411 = vpop.xlane.xlu0 %2410
    %v2412 = vcvt.f32.s32 %v2411
    %v2413 = vcvt.f32.s32 %v2407
    %v2414 = vshll.u32 %v2413, 16
    %v2415 = vadd.s32 %v2414, %v2412
    %v2416 = vand.u32 %v2386, 65535
    %v2417 = vshra.s32 %v2386, 16
    %v2418 = vcvt.s32.f32 %v2416
    %v2419 = vcvt.s32.f32 %v2417
    %2420 = vmin.xlane.f32.xlu0 %v2419
    %v2421 = vpop.xlane.xlu0 %2420
    %vm2422 = vcmp.eq.f32.partialorder %v2419, %v2421
    %v2423 = vsel %vm2422, %v2418, inf
    %2424 = vmin.xlane.f32.xlu0 %v2423
    %v2425 = vpop.xlane.xlu0 %2424
    %v2426 = vcvt.f32.s32 %v2425
    %v2427 = vcvt.f32.s32 %v2421
    %v2428 = vshll.u32 %v2427, 16
    %v2429 = vadd.s32 %v2428, %v2426
    %v2430 = vand.u32 %v2387, 65535
    %v2431 = vshra.s32 %v2387, 16
    %v2432 = vcvt.s32.f32 %v2430
    %v2433 = vcvt.s32.f32 %v2431
    %2434 = vmin.xlane.f32.xlu0 %v2433
    %v2435 = vpop.xlane.xlu0 %2434
    %vm2436 = vcmp.eq.f32.partialorder %v2433, %v2435
    %v2437 = vsel %vm2436, %v2432, inf
    %2438 = vmin.xlane.f32.xlu0 %v2437
    %v2439 = vpop.xlane.xlu0 %2438
    %v2440 = vcvt.f32.s32 %v2439
    %v2441 = vcvt.f32.s32 %v2435
    %v2442 = vshll.u32 %v2441, 16
    %v2443 = vadd.s32 %v2442, %v2440
    %vm2444 = vcmp.eq.s32.totalorder %v2291, %v2401
    %vm2445 = vcmp.eq.s32.totalorder %v2291, %v2415
    %vm2446 = vcmp.eq.s32.totalorder %v2291, %v2429
    %vm2447 = vcmp.eq.s32.totalorder %v2291, %v2443
    %v2448 = vsel %vm2444, -1e+30, %v2368
    %v2449 = vsel %vm2445, -1e+30, %v2369
    %v2450 = vsel %vm2446, -1e+30, %v2370
    %v2451 = vsel %vm2447, -1e+30, %v2371
    %2452 = vmax.xlane.f32.xlu0 %v2448
    %v2453 = vpop.xlane.xlu0 %2452
    %2454 = vmax.xlane.f32.xlu0 %v2449
    %v2455 = vpop.xlane.xlu0 %2454
    %2456 = vmax.xlane.f32.xlu0 %v2450
    %v2457 = vpop.xlane.xlu0 %2456
    %2458 = vmax.xlane.f32.xlu0 %v2451
    %v2459 = vpop.xlane.xlu0 %2458
    %vm2460 = vcmp.ge.f32.partialorder %v2448, %v2453
    %vm2461 = vcmp.ge.f32.partialorder %v2449, %v2455
    %vm2462 = vcmp.ge.f32.partialorder %v2450, %v2457
    %vm2463 = vcmp.ge.f32.partialorder %v2451, %v2459
    %v2464 = vsel %vm2460, %v2291, 128
    %v2465 = vsel %vm2461, %v2291, 128
    %v2466 = vsel %vm2462, %v2291, 128
    %v2467 = vsel %vm2463, %v2291, 128
    %v2468 = vand.u32 %v2464, 65535
    %v2469 = vshra.s32 %v2464, 16
    %v2470 = vcvt.s32.f32 %v2468
    %v2471 = vcvt.s32.f32 %v2469
    %2472 = vmin.xlane.f32.xlu0 %v2471
    %v2473 = vpop.xlane.xlu0 %2472
    %vm2474 = vcmp.eq.f32.partialorder %v2471, %v2473
    %v2475 = vsel %vm2474, %v2470, inf
    %2476 = vmin.xlane.f32.xlu0 %v2475
    %v2477 = vpop.xlane.xlu0 %2476
    %v2478 = vcvt.f32.s32 %v2477
    %v2479 = vcvt.f32.s32 %v2473
    %v2480 = vshll.u32 %v2479, 16
    %v2481 = vadd.s32 %v2480, %v2478
    %v2482 = vand.u32 %v2465, 65535
    %v2483 = vshra.s32 %v2465, 16
    %v2484 = vcvt.s32.f32 %v2482
    %v2485 = vcvt.s32.f32 %v2483
    %2486 = vmin.xlane.f32.xlu0 %v2485
    %v2487 = vpop.xlane.xlu0 %2486
    %vm2488 = vcmp.eq.f32.partialorder %v2485, %v2487
    %v2489 = vsel %vm2488, %v2484, inf
    %2490 = vmin.xlane.f32.xlu0 %v2489
    %v2491 = vpop.xlane.xlu0 %2490
    %v2492 = vcvt.f32.s32 %v2491
    %v2493 = vcvt.f32.s32 %v2487
    %v2494 = vshll.u32 %v2493, 16
    %v2495 = vadd.s32 %v2494, %v2492
    %v2496 = vand.u32 %v2466, 65535
    %v2497 = vshra.s32 %v2466, 16
    %v2498 = vcvt.s32.f32 %v2496
    %v2499 = vcvt.s32.f32 %v2497
    %2500 = vmin.xlane.f32.xlu0 %v2499
    %v2501 = vpop.xlane.xlu0 %2500
    %vm2502 = vcmp.eq.f32.partialorder %v2499, %v2501
    %v2503 = vsel %vm2502, %v2498, inf
    %2504 = vmin.xlane.f32.xlu0 %v2503
    %v2505 = vpop.xlane.xlu0 %2504
    %v2506 = vcvt.f32.s32 %v2505
    %v2507 = vcvt.f32.s32 %v2501
    %v2508 = vshll.u32 %v2507, 16
    %v2509 = vadd.s32 %v2508, %v2506
    %v2510 = vand.u32 %v2467, 65535
    %v2511 = vshra.s32 %v2467, 16
    %v2512 = vcvt.s32.f32 %v2510
    %v2513 = vcvt.s32.f32 %v2511
    %2514 = vmin.xlane.f32.xlu0 %v2513
    %v2515 = vpop.xlane.xlu0 %2514
    %vm2516 = vcmp.eq.f32.partialorder %v2513, %v2515
    %v2517 = vsel %vm2516, %v2512, inf
    %2518 = vmin.xlane.f32.xlu0 %v2517
    %v2519 = vpop.xlane.xlu0 %2518
    %v2520 = vcvt.f32.s32 %v2519
    %v2521 = vcvt.f32.s32 %v2515
    %v2522 = vshll.u32 %v2521, 16
    %v2523 = vadd.s32 %v2522, %v2520
    %vm2524 = vcmp.eq.s32.totalorder %v2291, %v2481
    %vm2525 = vcmp.eq.s32.totalorder %v2291, %v2495
    %vm2526 = vcmp.eq.s32.totalorder %v2291, %v2509
    %vm2527 = vcmp.eq.s32.totalorder %v2291, %v2523
    %v2528 = vsub.f32 %v2373, %v2293
    %v2529 = vsub.f32 %v2375, %v2295
    %v2530 = vsub.f32 %v2377, %v2297
    %v2531 = vsub.f32 %v2379, %v2299
    %v2532 = vmul.f32 %v2528, 1.442695
    %v2533 = vpow.pop %v2532
    %v2534 = vmul.f32 %v2529, 1.442695
    %v2535 = vpow.pop %v2534
    %v2536 = vmul.f32 %v2530, 1.442695
    %v2537 = vpow.pop %v2536
    %v2538 = vmul.f32 %v2531, 1.442695
    %v2539 = vpow.pop %v2538
    %v2540 = vsub.f32 %v2453, %v2293
    %v2541 = vsub.f32 %v2455, %v2295
    %v2542 = vsub.f32 %v2457, %v2297
    %v2543 = vsub.f32 %v2459, %v2299
    %v2544 = vmul.f32 %v2540, 1.442695
    %v2545 = vpow.pop %v2544
    %v2546 = vmul.f32 %v2541, 1.442695
    %v2547 = vpow.pop %v2546
    %v2548 = vmul.f32 %v2542, 1.442695
    %v2549 = vpow.pop %v2548
    %v2550 = vmul.f32 %v2543, 1.442695
    %v2551 = vpow.pop %v2550
    %v2552 = vadd.f32 %v2533, 1.0
    %v2553 = vadd.f32 %v2535, 1.0
    %v2554 = vadd.f32 %v2537, 1.0
    %v2555 = vadd.f32 %v2539, 1.0
    %v2556 = vadd.f32 %v2552, %v2545
    %v2557 = vadd.f32 %v2553, %v2547
    %v2558 = vadd.f32 %v2554, %v2549
    %v2559 = vadd.f32 %v2555, %v2551
    %v2560 = vrcp.pop %v2556
    %v2561 = vrcp.pop %v2557
    %v2562 = vrcp.pop %v2558
    %v2563 = vrcp.pop %v2559
    %v2564 = vsel %vm2364, %v2560, 0.0
    %v2565 = vsel %vm2365, %v2561, 0.0
    %v2566 = vsel %vm2366, %v2562, 0.0
    %v2567 = vsel %vm2367, %v2563, 0.0
    %v2568 = vmul.f32 %v2533, %v2560
    %v2569 = vmul.f32 %v2535, %v2561
    %v2570 = vmul.f32 %v2537, %v2562
    %v2571 = vmul.f32 %v2539, %v2563
    %v2572 = vsel %vm2444, %v2568, %v2564
    %v2573 = vsel %vm2445, %v2569, %v2565
    %v2574 = vsel %vm2446, %v2570, %v2566
    %v2575 = vsel %vm2447, %v2571, %v2567
    %v2576 = vmul.f32 %v2545, %v2560
    %v2577 = vmul.f32 %v2547, %v2561
    %v2578 = vmul.f32 %v2549, %v2562
    %v2579 = vmul.f32 %v2551, %v2563
    %v2580 = vsel %vm2524, %v2576, %v2572
    %v2581 = vsel %vm2525, %v2577, %v2573
    %v2582 = vsel %vm2526, %v2578, %v2574
    %v2583 = vsel %vm2527, %v2579, %v2575
    %2584 = vst [vmem:[#allocation2] sm:$0xff] %v2580
    %2585 = vst [vmem:[#allocation2 + $0x8] sm:$0xff] %v2581
    %2586 = vst [vmem:[#allocation2 + $0x10] sm:$0xff] %v2582
    %2587 = vst [vmem:[#allocation2 + $0x18] sm:$0xff] %v2583
    // Predicated region
    $region14: #{tpu_custom_call.1} parent=1 // pred_check
      _
    $region15: #{tpu_custom_call.1} parent=1 // pred_check_branch
      %2589 = sbr.rel (0) target = $region17
    $region16: #{tpu_custom_call.1} parent=1 // pred_region
      %2591 = vsyncadd [#allocation3], 0
      %s2592 = sshll.u32 [#allocation2], 4
      %s2593 = int_to_ptr.vmem [resolvable:$true] %s2592
      %s2594 = sshll.u32 %s3, 4
      %s2595 = int_to_ptr.hbm [resolvable:$true] %s2594
      %2600 = dma.vmem_to_hbm [thread:$0]  %s2593, 512, %s2595, [#allocation3], 128, 128, 8
    $region17: #{tpu_custom_call.1} parent=1 // pred_fallthru
      _
    // Predicated region
    $region18: #{tpu_custom_call.1} parent=1 // pred_check
      _
    $region19: #{tpu_custom_call.1} parent=1 // pred_check_branch
      %2602 = sbr.rel (0) target = $region21
    $region20: #{tpu_custom_call.1} parent=1 // pred_region
      %2604 = dma.done [#allocation3], 512
    $region21: #{tpu_custom_call.1} parent=1 // pred_fallthru
      _
    %2605 = vsyncpa [#allocation3], 1

</llo_original>
